<compile_context>
chip_gen: v7x
topology: tpu7x:2x2x1
jax: 0.10.0
libtpu: 0.0.40
codegen_flags: <defaults>
</compile_context>

<pallas_src>
import functools

import jax
import jax.numpy as jnp
from jax.experimental import pallas as pl
from jax.experimental.pallas import tpu as pltpu


def _make_divisible(v, divisor, min_value=None):
    if min_value is None:
        min_value = divisor
    new_v = max(min_value, int(v + divisor / 2) // divisor * divisor)
    if new_v < 0.9 * v:
        new_v += divisor
    return new_v


def _leaky(x, slope=0.2):
    return jnp.where(x > 0, x, slope * x)


def mbconv_kernel(xp_ref, mask_ref, we_ref, wdw_ref, wfc1_ref, bfc1_ref,
                  wfc2_ref, bfc2_ref, wproj_ref, o_ref, *, wp, hw):
    # xp_ref   : (Cin, Np)   channel-major input, spatially zero-padded by 1,
    #                        flattened row-major over (Hp, Wp), lane-padded to Np.
    # mask_ref : (1, Np)     1.0 at flattened positions mapping to valid outputs.
    # we_ref   : (hid, Cin)  1x1 expand weight (pre-transposed).
    # wdw_ref  : (hid, 9)    3x3 depthwise weights, tap index di*3+dj on lanes.
    # wfc1_ref : (hid, se_h), bfc1_ref : (1, se_h)   SE fc1.
    # wfc2_ref : (hid, se_h), bfc2_ref : (hid, 1)    SE fc2 (pre-transposed).
    # wproj_ref: (Cout, hid) 1x1 project weight (pre-transposed).
    # o_ref    : (Cout, Np)  lane-dense output (valid values at interior columns).
    np_total = xp_ref.shape[1]

    xp = xp_ref[...]                                          # (Cin, Np)

    # --- 1x1 expand + LeakyReLU (pad columns stay 0: bias-free, leaky(0)=0) ---
    h = jnp.dot(we_ref[...], xp, preferred_element_type=jnp.float32)   # (hid, Np)
    h = _leaky(h)

    # --- 3x3 depthwise, stride 1: shifted taps as XLU lane-rolls of the
    # flattened padded grid. Valid (interior) columns never read wrapped data;
    # wrap garbage only lands on pad columns, which are masked / discarded. ---
    wdw = wdw_ref[...]                                        # (hid, 9)
    dw = h * wdw[:, 4:5]                                      # center tap (1,1)
    for di in range(3):
        for dj in range(3):
            if di == 1 and dj == 1:
                continue
            off = (di - 1) * wp + (dj - 1)
            shift = (-off) % np_total                         # static python int
            tap = di * 3 + dj
            dw = dw + pltpu.roll(h, shift, 1) * wdw[:, tap:tap + 1]
    dw = _leaky(dw) * mask_ref[...]                           # zero pad/garbage cols

    # --- Squeeze-and-Excite on VPU/XLU/EUP (no tiny MXU matmuls) ---
    y = jnp.sum(dw, axis=1, keepdims=True) * (1.0 / float(hw))            # (hid, 1)
    y1 = jnp.sum(y * wfc1_ref[...], axis=0, keepdims=True) + bfc1_ref[...]  # (1, se_h)
    y1 = y1 * jax.nn.sigmoid(y1)                                           # SiLU
    y2 = jnp.sum(y1 * wfc2_ref[...], axis=1, keepdims=True) + bfc2_ref[...]  # (hid, 1)
    y2 = jax.nn.sigmoid(y2)
    scaled = dw * y2                                                        # (hid, Np)

    # --- 1x1 project + residual (inp==oup, stride==1 -> identity branch).
    # xp is already resident and holds x at every valid column. ---
    out = jnp.dot(wproj_ref[...], scaled, preferred_element_type=jnp.float32)  # (Cout, Np)
    o_ref[...] = (out + xp).astype(o_ref.dtype)


def mbconv_pallas(x_nchw, params):
    B, C, H, W = x_nchw.shape
    hid = params['w_expand'].shape[1]
    Cout = params['w_proj'].shape[1]
    assert C == Cout, "fused kernel covers the stride=1, inp==oup (identity) MBConv"

    Hp, Wp = H + 2, W + 2                         # 3x3 depthwise halo
    npad = Hp * Wp
    Np = ((npad + 127) // 128) * 128              # lane-pad: full-tile rolls/stores

    # channel-major (no transposes): NCHW -> pad spatial -> flatten -> lane-pad.
    xp = jnp.pad(x_nchw, ((0, 0), (0, 0), (1, 1), (1, 1))).reshape(B, C, npad)
    xp = jnp.pad(xp, ((0, 0), (0, 0), (0, Np - npad)))

    # validity mask over the flattened padded grid.
    mask2d = jnp.zeros((Hp, Wp), jnp.float32).at[1:H + 1, 1:W + 1].set(1.0)
    mask = jnp.pad(mask2d.reshape(1, npad), ((0, 0), (0, Np - npad)))

    # pre-transpose the small weights so the kernel is pure broadcast / matmul.
    we_t = params['w_expand'].T                   # (hid, Cin)
    wdw_t = params['w_dw'].reshape(9, hid).T      # (hid, 9): taps on lanes
    wfc2_t = params['w_fc2'].T                    # (hid, se_h)
    bfc2_t = params['b_fc2'].T                    # (hid, 1)
    wproj_t = params['w_proj'].T                  # (Cout, hid)

    kernel = functools.partial(mbconv_kernel, wp=Wp, hw=H * W)
    const = lambda b: (0, 0)

    out_flat = pl.pallas_call(
        kernel,
        out_shape=jax.ShapeDtypeStruct((B, Cout, Np), x_nchw.dtype),
        grid=(B,),
        in_specs=[
            pl.BlockSpec((None, C, Np), lambda b: (b, 0, 0)),
            pl.BlockSpec((1, Np), const),
            pl.BlockSpec(we_t.shape, const),
            pl.BlockSpec(wdw_t.shape, const),
            pl.BlockSpec(params['w_fc1'].shape, const),
            pl.BlockSpec(params['b_fc1'].shape, const),
            pl.BlockSpec(wfc2_t.shape, const),
            pl.BlockSpec(bfc2_t.shape, const),
            pl.BlockSpec(wproj_t.shape, const),
        ],
        out_specs=pl.BlockSpec((None, Cout, Np), lambda b: (b, 0, 0)),
        compiler_params=pltpu.CompilerParams(dimension_semantics=("parallel",)),
    )(xp, mask, we_t, wdw_t, params['w_fc1'], params['b_fc1'],
      wfc2_t, bfc2_t, wproj_t)

    # channel-major output -> NCHW is just a reshape + interior slice (no transpose).
    out = out_flat[:, :, :npad].reshape(B, Cout, Hp, Wp)[:, :, 1:H + 1, 1:W + 1]
    return out


def mbconv_ref(x, p):
    """Pure-JAX reference (NCHW, mirrors the PyTorch forward)."""
    h = _leaky(jnp.einsum('bchw,cd->bdhw', x, p['w_expand']))
    wdw_oihw = jnp.transpose(p['w_dw'], (2, 0, 1))[:, None, :, :]     # (hid,1,3,3)
    dw = jax.lax.conv_general_dilated(
        h, wdw_oihw, window_strides=(1, 1), padding=((1, 1), (1, 1)),
        feature_group_count=h.shape[1],
        dimension_numbers=('NCHW', 'OIHW', 'NCHW'))
    dw = _leaky(dw)
    y = dw.mean(axis=(2, 3))                                          # (B, hid)
    y1 = jax.nn.silu(y @ p['w_fc1'] + p['b_fc1'][0])
    y2 = jax.nn.sigmoid(y1 @ p['w_fc2'] + p['b_fc2'][0])
    scaled = dw * y2[:, :, None, None]
    out = jnp.einsum('bchw,ck->bkhw', scaled, p['w_proj'])
    return x + out


if __name__ == "__main__":
    # MBConv(inp=8, oup=8, stride=1, expand_ratio=4, use_se=True) -> identity active
    inp = oup = 8
    expand_ratio = 4
    hid = round(inp * expand_ratio)                 # 32
    se_h = _make_divisible(inp // 4, 8)             # 8
    B, H, W = 2, 16, 16

    key = jax.random.PRNGKey(0)
    ks = jax.random.split(key, 8)
    params = {
        'w_expand': jax.random.normal(ks[0], (inp, hid), jnp.float32) * 0.3,   # 1x1 expand
        'w_dw':     jax.random.normal(ks[1], (3, 3, hid), jnp.float32) * 0.3,  # 3x3 depthwise
        'w_fc1':    jax.random.normal(ks[2], (hid, se_h), jnp.float32) * 0.3,  # SE fc1
        'b_fc1':    jax.random.normal(ks[3], (1, se_h), jnp.float32) * 0.1,
        'w_fc2':    jax.random.normal(ks[4], (se_h, hid), jnp.float32) * 0.3,  # SE fc2
        'b_fc2':    jax.random.normal(ks[5], (1, hid), jnp.float32) * 0.1,
        'w_proj':   jax.random.normal(ks[6], (hid, oup), jnp.float32) * 0.3,   # 1x1 project
    }
    x = jax.random.normal(ks[7], (B, inp, H, W), jnp.float32)

    out = jax.block_until_ready(mbconv_pallas(x, params))
    ref = jax.block_until_ready(mbconv_ref(x, params))

    assert out.shape == (B, oup, H, W), out.shape
    if not jnp.allclose(out, ref, rtol=1e-4, atol=1e-4):
        raise AssertionError(
            f"mismatch: max abs diff {float(jnp.max(jnp.abs(out - ref)))}")
    print("KERNEL_OK")
</pallas_src>

<mosaic_0001>
module attributes {stable_mosaic.version = 11 : i64} {
  func.func @mbconv_kernel(%arg0: i32, %arg1: memref<1x8x384xf32, #tpu.memory_space<vmem>>, %arg2: memref<1x384xf32, #tpu.memory_space<vmem>>, %arg3: memref<32x8xf32, #tpu.memory_space<vmem>>, %arg4: memref<32x9xf32, #tpu.memory_space<vmem>>, %arg5: memref<32x8xf32, #tpu.memory_space<vmem>>, %arg6: memref<1x8xf32, #tpu.memory_space<vmem>>, %arg7: memref<32x8xf32, #tpu.memory_space<vmem>>, %arg8: memref<32x1xf32, #tpu.memory_space<vmem>>, %arg9: memref<8x32xf32, #tpu.memory_space<vmem>>, %arg10: memref<1x8x384xf32, #tpu.memory_space<vmem>>) attributes {dimension_semantics = [#tpu.dimension_semantics<parallel>], iteration_bounds = array<i64: 2>, scalar_prefetch = 0 : i64, scratch_operands = 0 : i64, tpu.core_type = #tpu.core_type<tc>, window_params = [{transform_indices = @transform_0, window_bounds = array<i64: 1, 8, 384>}, {pipeline_mode = #tpu.pipeline_mode<synchronous>, transform_indices = @transform_1, window_bounds = array<i64: 1, 384>}, {pipeline_mode = #tpu.pipeline_mode<synchronous>, transform_indices = @transform_2, window_bounds = array<i64: 32, 8>}, {pipeline_mode = #tpu.pipeline_mode<synchronous>, transform_indices = @transform_3, window_bounds = array<i64: 32, 9>}, {pipeline_mode = #tpu.pipeline_mode<synchronous>, transform_indices = @transform_4, window_bounds = array<i64: 32, 8>}, {pipeline_mode = #tpu.pipeline_mode<synchronous>, transform_indices = @transform_5, window_bounds = array<i64: 1, 8>}, {pipeline_mode = #tpu.pipeline_mode<synchronous>, transform_indices = @transform_6, window_bounds = array<i64: 32, 8>}, {pipeline_mode = #tpu.pipeline_mode<synchronous>, transform_indices = @transform_7, window_bounds = array<i64: 32, 1>}, {pipeline_mode = #tpu.pipeline_mode<synchronous>, transform_indices = @transform_8, window_bounds = array<i64: 8, 32>}, {transform_indices = @transform_9, window_bounds = array<i64: 1, 8, 384>}]} {
    %c0 = arith.constant 0 : index
    %c0_0 = arith.constant 0 : index
    %c0_1 = arith.constant 0 : index
    %0 = vector.load %arg1[%c0, %c0_0, %c0_1] : memref<1x8x384xf32, #tpu.memory_space<vmem>>, vector<1x8x384xf32>
    %1 = vector.shape_cast %0 : vector<1x8x384xf32> to vector<8x384xf32>
    %c0_2 = arith.constant 0 : index
    %c0_3 = arith.constant 0 : index
    %2 = vector.load %arg3[%c0_2, %c0_3] : memref<32x8xf32, #tpu.memory_space<vmem>>, vector<32x8xf32>
    %cst = arith.constant dense<0.000000e+00> : vector<32x384xf32>
    %3 = tpu.matmul %2, %1, %cst {dimension_numbers = #tpu.dot_dimension_numbers<[1], [0], [0], [1], [0, 0, 1, 1], [], []>} : vector<32x8xf32>, vector<8x384xf32>, vector<32x384xf32> -> vector<32x384xf32>
    %cst_4 = arith.constant 0.000000e+00 : f32
    %4 = vector.broadcast %cst_4 : f32 to vector<32x384xf32>
    %5 = arith.cmpf ogt, %3, %4 : vector<32x384xf32>
    %cst_5 = arith.constant 2.000000e-01 : f32
    %6 = vector.broadcast %cst_5 : f32 to vector<32x384xf32>
    %7 = arith.mulf %6, %3 : vector<32x384xf32>
    %8 = arith.select %5, %3, %7 : vector<32x384xi1>, vector<32x384xf32>
    %c0_6 = arith.constant 0 : index
    %c0_7 = arith.constant 0 : index
    %9 = vector.load %arg4[%c0_6, %c0_7] : memref<32x9xf32, #tpu.memory_space<vmem>>, vector<32x9xf32>
    %10 = vector.extract_strided_slice %9 {offsets = [0, 4], sizes = [32, 1], strides = [1, 1]} : vector<32x9xf32> to vector<32x1xf32>
    %11 = vector.broadcast %10 : vector<32x1xf32> to vector<32x384xf32>
    %12 = arith.mulf %8, %11 : vector<32x384xf32>
    %c19_i32 = arith.constant 19 : i32
    %13 = tpu.dynamic_rotate %8 by %c19_i32 dim 1 : vector<32x384xf32>, i32 -> vector<32x384xf32>
    %14 = vector.extract_strided_slice %9 {offsets = [0, 0], sizes = [32, 1], strides = [1, 1]} : vector<32x9xf32> to vector<32x1xf32>
    %15 = vector.broadcast %14 : vector<32x1xf32> to vector<32x384xf32>
    %16 = arith.mulf %13, %15 : vector<32x384xf32>
    %17 = arith.addf %12, %16 : vector<32x384xf32>
    %c18_i32 = arith.constant 18 : i32
    %18 = tpu.dynamic_rotate %8 by %c18_i32 dim 1 : vector<32x384xf32>, i32 -> vector<32x384xf32>
    %19 = vector.extract_strided_slice %9 {offsets = [0, 1], sizes = [32, 1], strides = [1, 1]} : vector<32x9xf32> to vector<32x1xf32>
    %20 = vector.broadcast %19 : vector<32x1xf32> to vector<32x384xf32>
    %21 = arith.mulf %18, %20 : vector<32x384xf32>
    %22 = arith.addf %17, %21 : vector<32x384xf32>
    %c17_i32 = arith.constant 17 : i32
    %23 = tpu.dynamic_rotate %8 by %c17_i32 dim 1 : vector<32x384xf32>, i32 -> vector<32x384xf32>
    %24 = vector.extract_strided_slice %9 {offsets = [0, 2], sizes = [32, 1], strides = [1, 1]} : vector<32x9xf32> to vector<32x1xf32>
    %25 = vector.broadcast %24 : vector<32x1xf32> to vector<32x384xf32>
    %26 = arith.mulf %23, %25 : vector<32x384xf32>
    %27 = arith.addf %22, %26 : vector<32x384xf32>
    %c1_i32 = arith.constant 1 : i32
    %28 = tpu.dynamic_rotate %8 by %c1_i32 dim 1 : vector<32x384xf32>, i32 -> vector<32x384xf32>
    %29 = vector.extract_strided_slice %9 {offsets = [0, 3], sizes = [32, 1], strides = [1, 1]} : vector<32x9xf32> to vector<32x1xf32>
    %30 = vector.broadcast %29 : vector<32x1xf32> to vector<32x384xf32>
    %31 = arith.mulf %28, %30 : vector<32x384xf32>
    %32 = arith.addf %27, %31 : vector<32x384xf32>
    %c383_i32 = arith.constant 383 : i32
    %33 = tpu.dynamic_rotate %8 by %c383_i32 dim 1 : vector<32x384xf32>, i32 -> vector<32x384xf32>
    %34 = vector.extract_strided_slice %9 {offsets = [0, 5], sizes = [32, 1], strides = [1, 1]} : vector<32x9xf32> to vector<32x1xf32>
    %35 = vector.broadcast %34 : vector<32x1xf32> to vector<32x384xf32>
    %36 = arith.mulf %33, %35 : vector<32x384xf32>
    %37 = arith.addf %32, %36 : vector<32x384xf32>
    %c367_i32 = arith.constant 367 : i32
    %38 = tpu.dynamic_rotate %8 by %c367_i32 dim 1 : vector<32x384xf32>, i32 -> vector<32x384xf32>
    %39 = vector.extract_strided_slice %9 {offsets = [0, 6], sizes = [32, 1], strides = [1, 1]} : vector<32x9xf32> to vector<32x1xf32>
    %40 = vector.broadcast %39 : vector<32x1xf32> to vector<32x384xf32>
    %41 = arith.mulf %38, %40 : vector<32x384xf32>
    %42 = arith.addf %37, %41 : vector<32x384xf32>
    %c366_i32 = arith.constant 366 : i32
    %43 = tpu.dynamic_rotate %8 by %c366_i32 dim 1 : vector<32x384xf32>, i32 -> vector<32x384xf32>
    %44 = vector.extract_strided_slice %9 {offsets = [0, 7], sizes = [32, 1], strides = [1, 1]} : vector<32x9xf32> to vector<32x1xf32>
    %45 = vector.broadcast %44 : vector<32x1xf32> to vector<32x384xf32>
    %46 = arith.mulf %43, %45 : vector<32x384xf32>
    %47 = arith.addf %42, %46 : vector<32x384xf32>
    %c365_i32 = arith.constant 365 : i32
    %48 = tpu.dynamic_rotate %8 by %c365_i32 dim 1 : vector<32x384xf32>, i32 -> vector<32x384xf32>
    %49 = vector.extract_strided_slice %9 {offsets = [0, 8], sizes = [32, 1], strides = [1, 1]} : vector<32x9xf32> to vector<32x1xf32>
    %50 = vector.broadcast %49 : vector<32x1xf32> to vector<32x384xf32>
    %51 = arith.mulf %48, %50 : vector<32x384xf32>
    %52 = arith.addf %47, %51 : vector<32x384xf32>
    %cst_8 = arith.constant 0.000000e+00 : f32
    %53 = vector.broadcast %cst_8 : f32 to vector<32x384xf32>
    %54 = arith.cmpf ogt, %52, %53 : vector<32x384xf32>
    %cst_9 = arith.constant 2.000000e-01 : f32
    %55 = vector.broadcast %cst_9 : f32 to vector<32x384xf32>
    %56 = arith.mulf %55, %52 : vector<32x384xf32>
    %57 = arith.select %54, %52, %56 : vector<32x384xi1>, vector<32x384xf32>
    %c0_10 = arith.constant 0 : index
    %c0_11 = arith.constant 0 : index
    %58 = vector.load %arg2[%c0_10, %c0_11] : memref<1x384xf32, #tpu.memory_space<vmem>>, vector<1x384xf32>
    %59 = vector.broadcast %58 : vector<1x384xf32> to vector<32x384xf32>
    %60 = arith.mulf %57, %59 : vector<32x384xf32>
    %cst_12 = arith.constant dense<0.000000e+00> : vector<32xf32>
    %61 = vector.multi_reduction <add>, %60, %cst_12 [1] : vector<32x384xf32> to vector<32xf32>
    %62 = vector.shape_cast %61 : vector<32xf32> to vector<32x1xf32>
    %cst_13 = arith.constant 3.906250e-03 : f32
    %63 = vector.broadcast %cst_13 : f32 to vector<32x1xf32>
    %64 = arith.mulf %62, %63 : vector<32x1xf32>
    %c0_14 = arith.constant 0 : index
    %c0_15 = arith.constant 0 : index
    %65 = vector.load %arg5[%c0_14, %c0_15] : memref<32x8xf32, #tpu.memory_space<vmem>>, vector<32x8xf32>
    %66 = vector.broadcast %64 : vector<32x1xf32> to vector<32x8xf32>
    %67 = arith.mulf %66, %65 : vector<32x8xf32>
    %cst_16 = arith.constant dense<0.000000e+00> : vector<8xf32>
    %68 = vector.multi_reduction <add>, %67, %cst_16 [0] : vector<32x8xf32> to vector<8xf32>
    %69 = vector.shape_cast %68 : vector<8xf32> to vector<1x8xf32>
    %c0_17 = arith.constant 0 : index
    %c0_18 = arith.constant 0 : index
    %70 = vector.load %arg6[%c0_17, %c0_18] : memref<1x8xf32, #tpu.memory_space<vmem>>, vector<1x8xf32>
    %71 = arith.addf %69, %70 : vector<1x8xf32>
    %72 = arith.negf %71 : vector<1x8xf32>
    %73 = math.exp %72 : vector<1x8xf32>
    %cst_19 = arith.constant 1.000000e+00 : f32
    %74 = vector.broadcast %cst_19 : f32 to vector<1x8xf32>
    %75 = arith.addf %74, %73 : vector<1x8xf32>
    %76 = arith.divf %74, %75 : vector<1x8xf32>
    %77 = arith.mulf %71, %76 : vector<1x8xf32>
    %c0_20 = arith.constant 0 : index
    %c0_21 = arith.constant 0 : index
    %78 = vector.load %arg7[%c0_20, %c0_21] : memref<32x8xf32, #tpu.memory_space<vmem>>, vector<32x8xf32>
    %79 = vector.broadcast %77 : vector<1x8xf32> to vector<32x8xf32>
    %80 = arith.mulf %79, %78 : vector<32x8xf32>
    %cst_22 = arith.constant dense<0.000000e+00> : vector<32xf32>
    %81 = vector.multi_reduction <add>, %80, %cst_22 [1] : vector<32x8xf32> to vector<32xf32>
    %82 = vector.shape_cast %81 : vector<32xf32> to vector<32x1xf32>
    %c0_23 = arith.constant 0 : index
    %c0_24 = arith.constant 0 : index
    %83 = vector.load %arg8[%c0_23, %c0_24] : memref<32x1xf32, #tpu.memory_space<vmem>>, vector<32x1xf32>
    %84 = arith.addf %82, %83 : vector<32x1xf32>
    %85 = arith.negf %84 : vector<32x1xf32>
    %86 = math.exp %85 : vector<32x1xf32>
    %cst_25 = arith.constant 1.000000e+00 : f32
    %87 = vector.broadcast %cst_25 : f32 to vector<32x1xf32>
    %88 = arith.addf %87, %86 : vector<32x1xf32>
    %89 = arith.divf %87, %88 : vector<32x1xf32>
    %90 = vector.broadcast %89 : vector<32x1xf32> to vector<32x384xf32>
    %91 = arith.mulf %60, %90 : vector<32x384xf32>
    %c0_26 = arith.constant 0 : index
    %c0_27 = arith.constant 0 : index
    %92 = vector.load %arg9[%c0_26, %c0_27] : memref<8x32xf32, #tpu.memory_space<vmem>>, vector<8x32xf32>
    %cst_28 = arith.constant dense<0.000000e+00> : vector<8x384xf32>
    %93 = tpu.matmul %92, %91, %cst_28 {dimension_numbers = #tpu.dot_dimension_numbers<[1], [0], [0], [1], [0, 0, 1, 1], [], []>} : vector<8x32xf32>, vector<32x384xf32>, vector<8x384xf32> -> vector<8x384xf32>
    %94 = arith.addf %93, %1 : vector<8x384xf32>
    %c0_29 = arith.constant 0 : index
    %c0_30 = arith.constant 0 : index
    %c0_31 = arith.constant 0 : index
    %95 = vector.load %arg10[%c0_29, %c0_30, %c0_31] : memref<1x8x384xf32, #tpu.memory_space<vmem>>, vector<1x8x384xf32>
    %96 = vector.shape_cast %95 : vector<1x8x384xf32> to vector<8x384xf32>
    %97 = vector.shape_cast %94 : vector<8x384xf32> to vector<1x8x384xf32>
    tpu.vector_store %arg10[%c0_29, %c0_30, %c0_31], %97 {strides = array<i32>} : memref<1x8x384xf32, #tpu.memory_space<vmem>>, vector<1x8x384xf32>,
    return
  }
  func.func @transform_0(%arg0: i32) -> (i32, i32, i32) {
    %c0_i32 = arith.constant 0 : i32
    %c0_i32_0 = arith.constant 0 : i32
    %c0_i32_1 = arith.constant 0 : i32
    return %arg0, %c0_i32, %c0_i32_0 : i32, i32, i32
  }
  func.func @transform_1(%arg0: i32) -> (i32, i32) {
    %c0_i32 = arith.constant 0 : i32
    %c0_i32_0 = arith.constant 0 : i32
    %c0_i32_1 = arith.constant 0 : i32
    return %c0_i32, %c0_i32_0 : i32, i32
  }
  func.func @transform_2(%arg0: i32) -> (i32, i32) {
    %c0_i32 = arith.constant 0 : i32
    %c0_i32_0 = arith.constant 0 : i32
    %c0_i32_1 = arith.constant 0 : i32
    return %c0_i32, %c0_i32_0 : i32, i32
  }
  func.func @transform_3(%arg0: i32) -> (i32, i32) {
    %c0_i32 = arith.constant 0 : i32
    %c0_i32_0 = arith.constant 0 : i32
    %c0_i32_1 = arith.constant 0 : i32
    return %c0_i32, %c0_i32_0 : i32, i32
  }
  func.func @transform_4(%arg0: i32) -> (i32, i32) {
    %c0_i32 = arith.constant 0 : i32
    %c0_i32_0 = arith.constant 0 : i32
    %c0_i32_1 = arith.constant 0 : i32
    return %c0_i32, %c0_i32_0 : i32, i32
  }
  func.func @transform_5(%arg0: i32) -> (i32, i32) {
    %c0_i32 = arith.constant 0 : i32
    %c0_i32_0 = arith.constant 0 : i32
    %c0_i32_1 = arith.constant 0 : i32
    return %c0_i32, %c0_i32_0 : i32, i32
  }
  func.func @transform_6(%arg0: i32) -> (i32, i32) {
    %c0_i32 = arith.constant 0 : i32
    %c0_i32_0 = arith.constant 0 : i32
    %c0_i32_1 = arith.constant 0 : i32
    return %c0_i32, %c0_i32_0 : i32, i32
  }
  func.func @transform_7(%arg0: i32) -> (i32, i32) {
    %c0_i32 = arith.constant 0 : i32
    %c0_i32_0 = arith.constant 0 : i32
    %c0_i32_1 = arith.constant 0 : i32
    return %c0_i32, %c0_i32_0 : i32, i32
  }
  func.func @transform_8(%arg0: i32) -> (i32, i32) {
    %c0_i32 = arith.constant 0 : i32
    %c0_i32_0 = arith.constant 0 : i32
    %c0_i32_1 = arith.constant 0 : i32
    return %c0_i32, %c0_i32_0 : i32, i32
  }
  func.func @transform_9(%arg0: i32) -> (i32, i32, i32) {
    %c0_i32 = arith.constant 0 : i32
    %c0_i32_0 = arith.constant 0 : i32
    %c0_i32_1 = arith.constant 0 : i32
    return %arg0, %c0_i32, %c0_i32_0 : i32, i32, i32
  }
}

</mosaic_0001>

<llo_original>
// kernel: tpu_custom_call.1
$region0: #{tpu_custom_call.1}
  #allocation0 [shape = 'u32[]', space=smem, size = 0x4, offset = 0x4, fixed_abs, tag = 'smem constant byte address 0x4 - core index']
  #allocation1 [shape = 'u32[144,128]{1,0:T(1,128)}', space=vmem, size = 0x12000, scoped, tag = 'internal scratch']
  %s0 = inlined_call_operand.vmem [shape: f32[2,8,384], index: 0, kind: input, shape index: {}]
  %s1 = inlined_call_operand.vmem [shape: f32[1,384], index: 1, kind: input, shape index: {}]
  %s2 = inlined_call_operand.vmem [shape: f32[32,8], index: 2, kind: input, shape index: {}]
  %s3 = inlined_call_operand.vmem [shape: f32[32,9], index: 3, kind: input, shape index: {}]
  %s4 = inlined_call_operand.vmem [shape: f32[32,8], index: 4, kind: input, shape index: {}]
  %s5 = inlined_call_operand.vmem [shape: f32[1,8], index: 5, kind: input, shape index: {}]
  %s6 = inlined_call_operand.vmem [shape: f32[32,8], index: 6, kind: input, shape index: {}]
  %s7 = inlined_call_operand.vmem [shape: f32[32,1], index: 7, kind: input, shape index: {}]
  %s8 = inlined_call_operand.vmem [shape: f32[8,32], index: 8, kind: input, shape index: {}]
  %s9 = inlined_call_operand.hbm [shape: f32[2,8,384], index: 9, kind: output, shape index: {}]
  %s10 = sld [smem:[#allocation0]]
  $region69: #{tpu_custom_call.1} parent=0
    _
  %s12 = ssub.s32 1, %s10
  %s13 = scalar_select 0, %s12, %s10
  $region1: #{tpu_custom_call.1} parent=0
    #allocation2 [shape = 'u8[24576]{0}', space=vmem, size = 0x6000, scoped, tag = 'output window, operand 0']
    #allocation3 [shape = 's32[2]{0}', space=sflag, size = 0x8, scoped, tag = 'scoped memory for tpu_custom_call.1']
    %14 = vsyncpa [#allocation3], 0
    %s15 = scalar_lea.sflag [#allocation3], 1
    %16 = vsyncpa %s15, 0
    loop: start=0, step=1, limit=4
    $region2: #{tpu_custom_call.1} parent=1 // loop_pre_header
      _
    $region3: #{tpu_custom_call.1} parent=1 // loop_header
      %s18 = sphi 0, %s22
      %p19 = scmp.ge.s32.totalorder %s18, 4
      %s28 = sphi 0, %s30
      %s31 = sphi 0, %s28
      %s32 = sphi 0, %s31
      %s48 = sphi 0, %s32
      %s52 = sphi 0, %s52
      %s54 = sphi 0, %s52
      %s55 = sphi 0, %s54
      %s69 = sphi 0, %s55
      %s73 = sphi 0, %s73
      %s75 = sphi 0, %s73
      %s76 = sphi 0, %s75
      %s90 = sphi 0, %s76
      %s94 = sphi 0, %s94
      %s96 = sphi 0, %s94
      %s97 = sphi 0, %s96
      %s111 = sphi 0, %s97
      %s115 = sphi 0, %s115
      %s117 = sphi 0, %s115
      %s118 = sphi 0, %s117
      %s132 = sphi 0, %s118
      %s136 = sphi 0, %s136
      %s138 = sphi 0, %s136
      %s139 = sphi 0, %s138
      %s153 = sphi 0, %s139
      %s157 = sphi 0, %s157
      %s159 = sphi 0, %s157
      %s160 = sphi 0, %s159
      %s174 = sphi 0, %s160
      %s178 = sphi 0, %s178
      %s180 = sphi 0, %s178
      %s181 = sphi 0, %s180
      %s195 = sphi 0, %s181
      %s199 = sphi 0, %s199
      %s201 = sphi 0, %s199
      %s202 = sphi 0, %s201
      %s216 = sphi 0, %s202
      %s222 = sphi 0, %s224
      %s225 = sphi 0, %s222
      %s226 = sphi 0, %s225
      %s242 = sphi 0, %s226
    $region4: #{tpu_custom_call.1} parent=1 // loop_header_branch
      %21 = sbr.rel (%p19) target = $region8
    $region5: #{tpu_custom_call.1} parent=1 // loop_body
      %s23 = ssub.s32 %s18, 1
      %s24 = ssub.s32 %s18, 2
      %s25 = sadd.s32 %s18, 1
      %s26 = ssub.s32 %s18, %s25
      %p27 = scmp.eq.s32.totalorder %s26, 0
      %s29 = sadd.s32 %s28, 1
      %s30 = scalar_select %p27, %s28, %s29
      %p33 = pneg %p27
      %p34 = scmp.eq.s32.totalorder %s18, 1
      %p35 = por %p33, %p34
      %p36 = scmp.ne.s32.totalorder %s28, %s31
      %p37 = scmp.eq.s32.totalorder %s18, 0
      %p38 = por %p36, %p37
      %p39 = scmp.ne.s32.totalorder %s28, %s31
      %p40 = scmp.eq.s32.totalorder %s23, 1
      %p41 = por %p39, %p40
      %p42 = scmp.ne.s32.totalorder %s31, %s32
      %p43 = scmp.eq.s32.totalorder %s23, 0
      %p44 = por %p42, %p43
      %p45 = scmp.ne.s32.totalorder %s31, %s32
      %p46 = scmp.eq.s32.totalorder %s24, 1
      %p47 = por %p45, %p46
      %p49 = scmp.ne.s32.totalorder %s32, %s48
      %p50 = scmp.eq.s32.totalorder %s24, 0
      %p51 = por %p49, %p50
      %s53 = sadd.s32 %s52, 1
      %p56 = scmp.eq.s32.totalorder %s18, 1
      %p57 = scmp.ne.s32.totalorder %s52, %s54
      %p58 = scmp.eq.s32.totalorder %s18, 0
      %p59 = por %p57, %p58
      %p60 = scmp.ne.s32.totalorder %s52, %s54
      %p61 = scmp.eq.s32.totalorder %s23, 1
      %p62 = por %p60, %p61
      %p63 = scmp.ne.s32.totalorder %s54, %s55
      %p64 = scmp.eq.s32.totalorder %s23, 0
      %p65 = por %p63, %p64
      %p66 = scmp.ne.s32.totalorder %s54, %s55
      %p67 = scmp.eq.s32.totalorder %s24, 1
      %p68 = por %p66, %p67
      %p70 = scmp.ne.s32.totalorder %s55, %s69
      %p71 = scmp.eq.s32.totalorder %s24, 0
      %p72 = por %p70, %p71
      %s74 = sadd.s32 %s73, 1
      %p77 = scmp.eq.s32.totalorder %s18, 1
      %p78 = scmp.ne.s32.totalorder %s73, %s75
      %p79 = scmp.eq.s32.totalorder %s18, 0
      %p80 = por %p78, %p79
      %p81 = scmp.ne.s32.totalorder %s73, %s75
      %p82 = scmp.eq.s32.totalorder %s23, 1
      %p83 = por %p81, %p82
      %p84 = scmp.ne.s32.totalorder %s75, %s76
      %p85 = scmp.eq.s32.totalorder %s23, 0
      %p86 = por %p84, %p85
      %p87 = scmp.ne.s32.totalorder %s75, %s76
      %p88 = scmp.eq.s32.totalorder %s24, 1
      %p89 = por %p87, %p88
      %p91 = scmp.ne.s32.totalorder %s76, %s90
      %p92 = scmp.eq.s32.totalorder %s24, 0
      %p93 = por %p91, %p92
      %s95 = sadd.s32 %s94, 1
      %p98 = scmp.eq.s32.totalorder %s18, 1
      %p99 = scmp.ne.s32.totalorder %s94, %s96
      %p100 = scmp.eq.s32.totalorder %s18, 0
      %p101 = por %p99, %p100
      %p102 = scmp.ne.s32.totalorder %s94, %s96
      %p103 = scmp.eq.s32.totalorder %s23, 1
      %p104 = por %p102, %p103
      %p105 = scmp.ne.s32.totalorder %s96, %s97
      %p106 = scmp.eq.s32.totalorder %s23, 0
      %p107 = por %p105, %p106
      %p108 = scmp.ne.s32.totalorder %s96, %s97
      %p109 = scmp.eq.s32.totalorder %s24, 1
      %p110 = por %p108, %p109
      %p112 = scmp.ne.s32.totalorder %s97, %s111
      %p113 = scmp.eq.s32.totalorder %s24, 0
      %p114 = por %p112, %p113
      %s116 = sadd.s32 %s115, 1
      %p119 = scmp.eq.s32.totalorder %s18, 1
      %p120 = scmp.ne.s32.totalorder %s115, %s117
      %p121 = scmp.eq.s32.totalorder %s18, 0
      %p122 = por %p120, %p121
      %p123 = scmp.ne.s32.totalorder %s115, %s117
      %p124 = scmp.eq.s32.totalorder %s23, 1
      %p125 = por %p123, %p124
      %p126 = scmp.ne.s32.totalorder %s117, %s118
      %p127 = scmp.eq.s32.totalorder %s23, 0
      %p128 = por %p126, %p127
      %p129 = scmp.ne.s32.totalorder %s117, %s118
      %p130 = scmp.eq.s32.totalorder %s24, 1
      %p131 = por %p129, %p130
      %p133 = scmp.ne.s32.totalorder %s118, %s132
      %p134 = scmp.eq.s32.totalorder %s24, 0
      %p135 = por %p133, %p134
      %s137 = sadd.s32 %s136, 1
      %p140 = scmp.eq.s32.totalorder %s18, 1
      %p141 = scmp.ne.s32.totalorder %s136, %s138
      %p142 = scmp.eq.s32.totalorder %s18, 0
      %p143 = por %p141, %p142
      %p144 = scmp.ne.s32.totalorder %s136, %s138
      %p145 = scmp.eq.s32.totalorder %s23, 1
      %p146 = por %p144, %p145
      %p147 = scmp.ne.s32.totalorder %s138, %s139
      %p148 = scmp.eq.s32.totalorder %s23, 0
      %p149 = por %p147, %p148
      %p150 = scmp.ne.s32.totalorder %s138, %s139
      %p151 = scmp.eq.s32.totalorder %s24, 1
      %p152 = por %p150, %p151
      %p154 = scmp.ne.s32.totalorder %s139, %s153
      %p155 = scmp.eq.s32.totalorder %s24, 0
      %p156 = por %p154, %p155
      %s158 = sadd.s32 %s157, 1
      %p161 = scmp.eq.s32.totalorder %s18, 1
      %p162 = scmp.ne.s32.totalorder %s157, %s159
      %p163 = scmp.eq.s32.totalorder %s18, 0
      %p164 = por %p162, %p163
      %p165 = scmp.ne.s32.totalorder %s157, %s159
      %p166 = scmp.eq.s32.totalorder %s23, 1
      %p167 = por %p165, %p166
      %p168 = scmp.ne.s32.totalorder %s159, %s160
      %p169 = scmp.eq.s32.totalorder %s23, 0
      %p170 = por %p168, %p169
      %p171 = scmp.ne.s32.totalorder %s159, %s160
      %p172 = scmp.eq.s32.totalorder %s24, 1
      %p173 = por %p171, %p172
      %p175 = scmp.ne.s32.totalorder %s160, %s174
      %p176 = scmp.eq.s32.totalorder %s24, 0
      %p177 = por %p175, %p176
      %s179 = sadd.s32 %s178, 1
      %p182 = scmp.eq.s32.totalorder %s18, 1
      %p183 = scmp.ne.s32.totalorder %s178, %s180
      %p184 = scmp.eq.s32.totalorder %s18, 0
      %p185 = por %p183, %p184
      %p186 = scmp.ne.s32.totalorder %s178, %s180
      %p187 = scmp.eq.s32.totalorder %s23, 1
      %p188 = por %p186, %p187
      %p189 = scmp.ne.s32.totalorder %s180, %s181
      %p190 = scmp.eq.s32.totalorder %s23, 0
      %p191 = por %p189, %p190
      %p192 = scmp.ne.s32.totalorder %s180, %s181
      %p193 = scmp.eq.s32.totalorder %s24, 1
      %p194 = por %p192, %p193
      %p196 = scmp.ne.s32.totalorder %s181, %s195
      %p197 = scmp.eq.s32.totalorder %s24, 0
      %p198 = por %p196, %p197
      %s200 = sadd.s32 %s199, 1
      %p203 = scmp.eq.s32.totalorder %s18, 1
      %p204 = scmp.ne.s32.totalorder %s199, %s201
      %p205 = scmp.eq.s32.totalorder %s18, 0
      %p206 = por %p204, %p205
      %p207 = scmp.ne.s32.totalorder %s199, %s201
      %p208 = scmp.eq.s32.totalorder %s23, 1
      %p209 = por %p207, %p208
      %p210 = scmp.ne.s32.totalorder %s201, %s202
      %p211 = scmp.eq.s32.totalorder %s23, 0
      %p212 = por %p210, %p211
      %p213 = scmp.ne.s32.totalorder %s201, %s202
      %p214 = scmp.eq.s32.totalorder %s24, 1
      %p215 = por %p213, %p214
      %p217 = scmp.ne.s32.totalorder %s202, %s216
      %p218 = scmp.eq.s32.totalorder %s24, 0
      %p219 = por %p217, %p218
      %s220 = ssub.s32 %s18, %s25
      %p221 = scmp.eq.s32.totalorder %s220, 0
      %s223 = sadd.s32 %s222, 1
      %s224 = scalar_select %p221, %s222, %s223
      %p227 = pneg %p221
      %p228 = scmp.eq.s32.totalorder %s18, 1
      %p229 = por %p227, %p228
      %p230 = scmp.ne.s32.totalorder %s222, %s225
      %p231 = scmp.eq.s32.totalorder %s18, 0
      %p232 = por %p230, %p231
      %p233 = scmp.ne.s32.totalorder %s222, %s225
      %p234 = scmp.eq.s32.totalorder %s23, 1
      %p235 = por %p233, %p234
      %p236 = scmp.ne.s32.totalorder %s225, %s226
      %p237 = scmp.eq.s32.totalorder %s23, 0
      %p238 = por %p236, %p237
      %p239 = scmp.ne.s32.totalorder %s225, %s226
      %p240 = scmp.eq.s32.totalorder %s24, 1
      %p241 = por %p239, %p240
      %p243 = scmp.ne.s32.totalorder %s226, %s242
      %p244 = scmp.eq.s32.totalorder %s24, 0
      %p245 = por %p243, %p244
      %p246 = scmp.le.s32.totalorder 1, %s18
      %p247 = scmp.lt.s32.totalorder %s18, 3
      %p248 = pnand %p246, %p247
      %p249 = pneg %p248
      // Predicated region
      $region9: #{tpu_custom_call.1} parent=5 // pred_check
        _
      $region10: #{tpu_custom_call.1} parent=5 // pred_check_branch
        %251 = sbr.rel (%p248) target = $region12
      $region11: #{tpu_custom_call.1} parent=5 // pred_region
        %s252 = ssub.s32 %s18, 1
        // Predicated region
        $region13: #{tpu_custom_call.1} parent=11 // pred_check
          %p253 = pneg %p65
        $region14: #{tpu_custom_call.1} parent=11 // pred_check_branch
          %255 = sbr.rel (%p253) target = $region16
        $region15: #{tpu_custom_call.1} parent=11 // pred_region
          _
        $region16: #{tpu_custom_call.1} parent=11 // pred_fallthru
          _
        // Predicated region
        $region17: #{tpu_custom_call.1} parent=11 // pred_check
          %p256 = pneg %p86
        $region18: #{tpu_custom_call.1} parent=11 // pred_check_branch
          %258 = sbr.rel (%p256) target = $region20
        $region19: #{tpu_custom_call.1} parent=11 // pred_region
          _
        $region20: #{tpu_custom_call.1} parent=11 // pred_fallthru
          _
        // Predicated region
        $region21: #{tpu_custom_call.1} parent=11 // pred_check
          %p259 = pneg %p107
        $region22: #{tpu_custom_call.1} parent=11 // pred_check_branch
          %261 = sbr.rel (%p259) target = $region24
        $region23: #{tpu_custom_call.1} parent=11 // pred_region
          _
        $region24: #{tpu_custom_call.1} parent=11 // pred_fallthru
          _
        // Predicated region
        $region25: #{tpu_custom_call.1} parent=11 // pred_check
          %p262 = pneg %p128
        $region26: #{tpu_custom_call.1} parent=11 // pred_check_branch
          %264 = sbr.rel (%p262) target = $region28
        $region27: #{tpu_custom_call.1} parent=11 // pred_region
          _
        $region28: #{tpu_custom_call.1} parent=11 // pred_fallthru
          _
        // Predicated region
        $region29: #{tpu_custom_call.1} parent=11 // pred_check
          %p265 = pneg %p149
        $region30: #{tpu_custom_call.1} parent=11 // pred_check_branch
          %267 = sbr.rel (%p265) target = $region32
        $region31: #{tpu_custom_call.1} parent=11 // pred_region
          _
        $region32: #{tpu_custom_call.1} parent=11 // pred_fallthru
          _
        // Predicated region
        $region33: #{tpu_custom_call.1} parent=11 // pred_check
          %p268 = pneg %p170
        $region34: #{tpu_custom_call.1} parent=11 // pred_check_branch
          %270 = sbr.rel (%p268) target = $region36
        $region35: #{tpu_custom_call.1} parent=11 // pred_region
          _
        $region36: #{tpu_custom_call.1} parent=11 // pred_fallthru
          _
        // Predicated region
        $region37: #{tpu_custom_call.1} parent=11 // pred_check
          %p271 = pneg %p191
        $region38: #{tpu_custom_call.1} parent=11 // pred_check_branch
          %273 = sbr.rel (%p271) target = $region40
        $region39: #{tpu_custom_call.1} parent=11 // pred_region
          _
        $region40: #{tpu_custom_call.1} parent=11 // pred_fallthru
          _
        // Predicated region
        $region41: #{tpu_custom_call.1} parent=11 // pred_check
          %p274 = pneg %p212
        $region42: #{tpu_custom_call.1} parent=11 // pred_check_branch
          %276 = sbr.rel (%p274) target = $region44
        $region43: #{tpu_custom_call.1} parent=11 // pred_region
          _
        $region44: #{tpu_custom_call.1} parent=11 // pred_fallthru
          _
      $region12: #{tpu_custom_call.1} parent=5 // pred_fallthru
        _
      %p277 = scmp.lt.s32.totalorder %s18, 2
      // Predicated region
      $region45: #{tpu_custom_call.1} parent=5 // pred_check
        %p278 = pneg %p277
      $region46: #{tpu_custom_call.1} parent=5 // pred_check_branch
        %280 = sbr.rel (%p278) target = $region48
      $region47: #{tpu_custom_call.1} parent=5 // pred_region
        // Predicated region
        $region49: #{tpu_custom_call.1} parent=47 // pred_check
          %p281 = pneg %p38
        $region50: #{tpu_custom_call.1} parent=47 // pred_check_branch
          %283 = sbr.rel (%p281) target = $region52
        $region51: #{tpu_custom_call.1} parent=47 // pred_region
          %p284 = scmp.lt.s32.totalorder %s18, 1
          %s285 = scalar_select %p284, %s18, 1
          %s286 = smul.addr %s285, 3
          %s287 = smul.addr %s286, 8
          %s288 = scalar_lea.vmem %s0, %s287
        $region52: #{tpu_custom_call.1} parent=47 // pred_fallthru
          _
      $region48: #{tpu_custom_call.1} parent=5 // pred_fallthru
        _
      %p289 = scmp.le.s32.totalorder 1, %s18
      %p290 = scmp.lt.s32.totalorder %s18, 3
      %p291 = pnand %p289, %p290
      %p292 = pneg %p291
      // Predicated region
      $region53: #{tpu_custom_call.1} parent=5 // pred_check
        _
      $region54: #{tpu_custom_call.1} parent=5 // pred_check_branch
        %294 = sbr.rel (%p291) target = $region56
      $region55: #{tpu_custom_call.1} parent=5 // pred_region
        %s295 = ssub.s32 %s18, 1
        %p296 = scmp.lt.s32.totalorder %s23, 1
        %s297 = scalar_select %p296, %s23, 1
        %s298 = smul.addr %s297, 3
        %s299 = smul.addr %s298, 8
        %s300 = scalar_lea.vmem %s0, %s299
        %p301 = pneg %p44
        %p302 = pneg %p41
        %p303 = pneg %p65
        %p304 = pneg %p62
        %p305 = pneg %p86
        %p306 = pneg %p83
        %p307 = pneg %p107
        %p308 = pneg %p104
        %p309 = pneg %p128
        %p310 = pneg %p125
        %p311 = pneg %p149
        %p312 = pneg %p146
        %p313 = pneg %p170
        %p314 = pneg %p167
        %p315 = pneg %p191
        %p316 = pneg %p188
        %p317 = pneg %p212
        %p318 = pneg %p209
        %p319 = pneg %p238
        %p320 = pneg %p235
        %s321 = sand.u32 %s225, 1
        %s322 = scalar_lea.sflag [#allocation3], %s321
        %s323 = sand.u32 %s225, 1
        %s324 = smul.addr %s323, 24
        %s325 = scalar_lea.vmem [#allocation2], %s324
        %p326 = scmp.lt.s32.totalorder %s23, 1
        %s327 = scalar_select %p326, %s23, 1
        %s328 = smul.addr %s327, 3
        %s329 = smul.addr %s328, 8
        %s330 = scalar_lea.vmem %s0, %s329
        %v331 = vld [vmem:[%s330] sm:$0xff]
        %v332 = vld [vmem:[%s330 + $0x8] sm:$0xff]
        %v333 = vld [vmem:[%s330 + $0x10] sm:$0xff]
        %v334 = vld [vmem:[%s2] sm:$0xff]
        %v335 = vld [vmem:[%s2 + $0x8] sm:$0xff]
        %v336 = vld [vmem:[%s2 + $0x10] sm:$0xff]
        %v337 = vld [vmem:[%s2 + $0x18] sm:$0xff]
        %vm338 = vcmask 64512
        %v340 = vsel %vm338, %v334, 0
        %v343 = vsel %vm338, %v335, 0
        %v346 = vsel %vm338, %v336, 0
        %v349 = vsel %vm338, %v337, 0
        %351 = vmatprep.subr.mxu0 %v332
        %352 = vmatpush1.msra.mxu0 %v331
        %353 = vmatprep.subr.mxu0 0.0
        %354 = vmatpush1.msra.mxu0 0.0
        %355 = vmatprep.subr.mxu0 0.0
        %356 = vmatpush1.msra.mxu0 0.0
        %357 = vmatprep.subr.mxu0 0.0
        %358 = vmatpush1.msra.mxu0 0.0
        %359 = vmatprep.subr.mxu0 0.0
        %360 = vmatpush1.msra.mxu0 0.0
        %361 = vmatprep.subr.mxu0 0.0
        %362 = vmatpush1.msra.mxu0 0.0
        %363 = vmatprep.subr.mxu0 0.0
        %364 = vmatpush1.msra.mxu0 0.0
        %365 = vmatprep.subr.mxu0 0.0
        %366 = vmatpush1.msra.mxu0 0.0
        %367 = vmatprep.subr.mxu0 0.0
        %368 = vmatpush1.msra.mxu0 0.0
        %369 = vmatprep.subr.mxu0 0.0
        %370 = vmatpush1.msra.mxu0 0.0
        %371 = vmatprep.subr.mxu0 0.0
        %372 = vmatpush1.msra.mxu0 0.0
        %373 = vmatprep.subr.mxu0 0.0
        %374 = vmatpush1.msra.mxu0 0.0
        %375 = vmatprep.subr.mxu0 0.0
        %376 = vmatpush1.msra.mxu0 0.0
        %377 = vmatprep.subr.mxu0 0.0
        %378 = vmatpush1.msra.mxu0 0.0
        %379 = vmatprep.subr.mxu0 0.0
        %380 = vmatpush1.msra.mxu0 0.0
        %381 = vmatprep.subr.mxu0 0.0
        %382 = vmatpush1.msra.mxu0 0.0
        %383 = vmatprep.subr.mxu0 0.0
        %384 = vmatpush1.msra.mxu0 0.0
        %385 = vmatprep.subr.mxu0 0.0
        %386 = vmatpush1.msra.mxu0 0.0
        %387 = vmatprep.subr.mxu0 0.0
        %388 = vmatpush1.msra.mxu0 0.0
        %389 = vmatprep.subr.mxu0 0.0
        %390 = vmatpush1.msra.mxu0 0.0
        %391 = vmatprep.subr.mxu0 0.0
        %392 = vmatpush1.msra.mxu0 0.0
        %393 = vmatprep.subr.mxu0 0.0
        %394 = vmatpush1.msra.mxu0 0.0
        %395 = vmatprep.subr.mxu0 0.0
        %396 = vmatpush1.msra.mxu0 0.0
        %397 = vmatprep.subr.mxu0 0.0
        %398 = vmatpush1.msra.mxu0 0.0
        %399 = vmatprep.subr.mxu0 0.0
        %400 = vmatpush1.msra.mxu0 0.0
        %401 = vmatprep.subr.mxu0 0.0
        %402 = vmatpush1.msra.mxu0 0.0
        %403 = vmatprep.subr.mxu0 0.0
        %404 = vmatpush1.msra.mxu0 0.0
        %405 = vmatprep.subr.mxu0 0.0
        %406 = vmatpush1.msra.mxu0 0.0
        %407 = vmatprep.subr.mxu0 0.0
        %408 = vmatpush1.msra.mxu0 0.0
        %409 = vmatprep.subr.mxu0 0.0
        %410 = vmatpush1.msra.mxu0 0.0
        %411 = vmatprep.subr.mxu0 0.0
        %412 = vmatpush1.msra.mxu0 0.0
        %413 = vmatprep.subr.mxu0 0.0
        %414 = vmatpush1.msra.mxu0 0.0
        %415 = vmatprep.mubr.f32.mxu0 0.0
        %416 = vmatmul.mubr.f32.gmra.mrb[0].mxu0 %v340
        %v417 = vpop.f32.mrb[0].mxu0
        %v418 = vadd.f32 0.0, %v417
        %v419 = vpop.f32.mrb[0].mxu0
        %v420 = vadd.f32 0.0, %v419
        %421 = vmatprep.mubr.f32.mxu0 0.0
        %422 = vmatmul.mubr.f32.gmra.mrb[0].mxu0 %v343
        %v423 = vpop.f32.mrb[0].mxu0
        %v424 = vadd.f32 0.0, %v423
        %v425 = vpop.f32.mrb[0].mxu0
        %v426 = vadd.f32 0.0, %v425
        %427 = vmatprep.mubr.f32.mxu0 0.0
        %428 = vmatmul.mubr.f32.gmra.mrb[0].mxu0 %v346
        %v429 = vpop.f32.mrb[0].mxu0
        %v430 = vadd.f32 0.0, %v429
        %v431 = vpop.f32.mrb[0].mxu0
        %v432 = vadd.f32 0.0, %v431
        %433 = vmatprep.mubr.f32.mxu0 0.0
        %434 = vmatmul.mubr.f32.gmra.mrb[0].mxu0 %v349
        %v435 = vpop.f32.mrb[0].mxu0
        %v436 = vadd.f32 0.0, %v435
        %v437 = vpop.f32.mrb[0].mxu0
        %v438 = vadd.f32 0.0, %v437
        %439 = vdwg.mxu0
        %440 = vmatprep.subr.mxu0 0.0
        %441 = vmatpush1.msra.mxu0 %v333
        %442 = vmatprep.subr.mxu0 0.0
        %443 = vmatpush1.msra.mxu0 0.0
        %444 = vmatprep.subr.mxu0 0.0
        %445 = vmatpush1.msra.mxu0 0.0
        %446 = vmatprep.subr.mxu0 0.0
        %447 = vmatpush1.msra.mxu0 0.0
        %448 = vmatprep.subr.mxu0 0.0
        %449 = vmatpush1.msra.mxu0 0.0
        %450 = vmatprep.subr.mxu0 0.0
        %451 = vmatpush1.msra.mxu0 0.0
        %452 = vmatprep.subr.mxu0 0.0
        %453 = vmatpush1.msra.mxu0 0.0
        %454 = vmatprep.subr.mxu0 0.0
        %455 = vmatpush1.msra.mxu0 0.0
        %456 = vmatprep.subr.mxu0 0.0
        %457 = vmatpush1.msra.mxu0 0.0
        %458 = vmatprep.subr.mxu0 0.0
        %459 = vmatpush1.msra.mxu0 0.0
        %460 = vmatprep.subr.mxu0 0.0
        %461 = vmatpush1.msra.mxu0 0.0
        %462 = vmatprep.subr.mxu0 0.0
        %463 = vmatpush1.msra.mxu0 0.0
        %464 = vmatprep.subr.mxu0 0.0
        %465 = vmatpush1.msra.mxu0 0.0
        %466 = vmatprep.subr.mxu0 0.0
        %467 = vmatpush1.msra.mxu0 0.0
        %468 = vmatprep.subr.mxu0 0.0
        %469 = vmatpush1.msra.mxu0 0.0
        %470 = vmatprep.subr.mxu0 0.0
        %471 = vmatpush1.msra.mxu0 0.0
        %472 = vmatprep.subr.mxu0 0.0
        %473 = vmatpush1.msra.mxu0 0.0
        %474 = vmatprep.subr.mxu0 0.0
        %475 = vmatpush1.msra.mxu0 0.0
        %476 = vmatprep.subr.mxu0 0.0
        %477 = vmatpush1.msra.mxu0 0.0
        %478 = vmatprep.subr.mxu0 0.0
        %479 = vmatpush1.msra.mxu0 0.0
        %480 = vmatprep.subr.mxu0 0.0
        %481 = vmatpush1.msra.mxu0 0.0
        %482 = vmatprep.subr.mxu0 0.0
        %483 = vmatpush1.msra.mxu0 0.0
        %484 = vmatprep.subr.mxu0 0.0
        %485 = vmatpush1.msra.mxu0 0.0
        %486 = vmatprep.subr.mxu0 0.0
        %487 = vmatpush1.msra.mxu0 0.0
        %488 = vmatprep.subr.mxu0 0.0
        %489 = vmatpush1.msra.mxu0 0.0
        %490 = vmatprep.subr.mxu0 0.0
        %491 = vmatpush1.msra.mxu0 0.0
        %492 = vmatprep.subr.mxu0 0.0
        %493 = vmatpush1.msra.mxu0 0.0
        %494 = vmatprep.subr.mxu0 0.0
        %495 = vmatpush1.msra.mxu0 0.0
        %496 = vmatprep.subr.mxu0 0.0
        %497 = vmatpush1.msra.mxu0 0.0
        %498 = vmatprep.subr.mxu0 0.0
        %499 = vmatpush1.msra.mxu0 0.0
        %500 = vmatprep.subr.mxu0 0.0
        %501 = vmatpush1.msra.mxu0 0.0
        %502 = vmatprep.subr.mxu0 0.0
        %503 = vmatpush1.msra.mxu0 0.0
        %504 = vmatprep.mubr.f32.mxu0 0.0
        %505 = vmatmul.mubr.f32.gmra.mrb[0].mxu0 %v340
        %v506 = vpop.f32.mrb[0].mxu0
        %v507 = vadd.f32 0.0, %v506
        %v508 = vpop.f32.mrb[0].mxu0
        %509 = vmatprep.mubr.f32.mxu0 0.0
        %510 = vmatmul.mubr.f32.gmra.mrb[0].mxu0 %v343
        %v511 = vpop.f32.mrb[0].mxu0
        %v512 = vadd.f32 0.0, %v511
        %v513 = vpop.f32.mrb[0].mxu0
        %514 = vmatprep.mubr.f32.mxu0 0.0
        %515 = vmatmul.mubr.f32.gmra.mrb[0].mxu0 %v346
        %v516 = vpop.f32.mrb[0].mxu0
        %v517 = vadd.f32 0.0, %v516
        %v518 = vpop.f32.mrb[0].mxu0
        %519 = vmatprep.mubr.f32.mxu0 0.0
        %520 = vmatmul.mubr.f32.gmra.mrb[0].mxu0 %v349
        %v521 = vpop.f32.mrb[0].mxu0
        %v522 = vadd.f32 0.0, %v521
        %v523 = vpop.f32.mrb[0].mxu0
        %524 = vdwg.mxu0
        %vm525 = vcmp.gt.f32.partialorder %v418, 0.0
        %vm526 = vcmp.gt.f32.partialorder %v420, 0.0
        %vm527 = vcmp.gt.f32.partialorder %v507, 0.0
        %vm528 = vcmp.gt.f32.partialorder %v424, 0.0
        %vm529 = vcmp.gt.f32.partialorder %v426, 0.0
        %vm530 = vcmp.gt.f32.partialorder %v512, 0.0
        %vm531 = vcmp.gt.f32.partialorder %v430, 0.0
        %vm532 = vcmp.gt.f32.partialorder %v432, 0.0
        %vm533 = vcmp.gt.f32.partialorder %v517, 0.0
        %vm534 = vcmp.gt.f32.partialorder %v436, 0.0
        %vm535 = vcmp.gt.f32.partialorder %v438, 0.0
        %vm536 = vcmp.gt.f32.partialorder %v522, 0.0
        %v537 = vmul.f32 %v418, 0.2
        %v538 = vmul.f32 %v420, 0.2
        %v539 = vmul.f32 %v507, 0.2
        %v540 = vmul.f32 %v424, 0.2
        %v541 = vmul.f32 %v426, 0.2
        %v542 = vmul.f32 %v512, 0.2
        %v543 = vmul.f32 %v430, 0.2
        %v544 = vmul.f32 %v432, 0.2
        %v545 = vmul.f32 %v517, 0.2
        %v546 = vmul.f32 %v436, 0.2
        %v547 = vmul.f32 %v438, 0.2
        %v548 = vmul.f32 %v522, 0.2
        %v549 = vsel %vm525, %v418, %v537
        %v550 = vsel %vm526, %v420, %v538
        %v551 = vsel %vm527, %v507, %v539
        %v552 = vsel %vm528, %v424, %v540
        %v553 = vsel %vm529, %v426, %v541
        %v554 = vsel %vm530, %v512, %v542
        %v555 = vsel %vm531, %v430, %v543
        %v556 = vsel %vm532, %v432, %v544
        %v557 = vsel %vm533, %v517, %v545
        %v558 = vsel %vm534, %v436, %v546
        %v559 = vsel %vm535, %v438, %v547
        %v560 = vsel %vm536, %v522, %v548
        %v561 = vld [vmem:[%s3] sm:$0xff]
        %v562 = vld [vmem:[%s3 + $0x8] sm:$0xff]
        %v563 = vld [vmem:[%s3 + $0x10] sm:$0xff]
        %v564 = vld [vmem:[%s3 + $0x18] sm:$0xff]
        %566 = vset.pattern.permute.xlu0 4
        %567 = vperm.xlu0 %566, %v561
        %v568 = vpop.permute.xlu0 %567
        %571 = vset.pattern.permute.xlu0 4
        %572 = vperm.xlu0 %571, %v562
        %v573 = vpop.permute.xlu0 %572
        %576 = vset.pattern.permute.xlu0 4
        %577 = vperm.xlu0 %576, %v563
        %v578 = vpop.permute.xlu0 %577
        %581 = vset.pattern.permute.xlu0 4
        %582 = vperm.xlu0 %581, %v564
        %v583 = vpop.permute.xlu0 %582
        %v585 = vmul.f32 %v549, %v568
        %v586 = vmul.f32 %v550, %v568
        %v587 = vmul.f32 %v551, %v568
        %v588 = vmul.f32 %v552, %v573
        %v589 = vmul.f32 %v553, %v573
        %v590 = vmul.f32 %v554, %v573
        %v591 = vmul.f32 %v555, %v578
        %v592 = vmul.f32 %v556, %v578
        %v593 = vmul.f32 %v557, %v578
        %v594 = vmul.f32 %v558, %v583
        %v595 = vmul.f32 %v559, %v583
        %v596 = vmul.f32 %v560, %v583
        %597 = vrot.lane.b32.xlu0 %v549, 19
        %v598 = vpop.permute.xlu0 %597
        %599 = vrot.lane.b32.xlu0 %v552, 19
        %v600 = vpop.permute.xlu0 %599
        %601 = vrot.lane.b32.xlu0 %v555, 19
        %v602 = vpop.permute.xlu0 %601
        %603 = vrot.lane.b32.xlu0 %v558, 19
        %v604 = vpop.permute.xlu0 %603
        %605 = vrot.lane.b32.xlu0 %v550, 19
        %v606 = vpop.permute.xlu0 %605
        %607 = vrot.lane.b32.xlu0 %v553, 19
        %v608 = vpop.permute.xlu0 %607
        %609 = vrot.lane.b32.xlu0 %v556, 19
        %v610 = vpop.permute.xlu0 %609
        %611 = vrot.lane.b32.xlu0 %v559, 19
        %v612 = vpop.permute.xlu0 %611
        %613 = vrot.lane.b32.xlu0 %v551, 19
        %v614 = vpop.permute.xlu0 %613
        %615 = vrot.lane.b32.xlu0 %v554, 19
        %v616 = vpop.permute.xlu0 %615
        %617 = vrot.lane.b32.xlu0 %v557, 19
        %v618 = vpop.permute.xlu0 %617
        %619 = vrot.lane.b32.xlu0 %v560, 19
        %v620 = vpop.permute.xlu0 %619
        %v621 = vlaneseq
        %v622 = vand.u32 %v621, 127
        %vm623 = vcmp.lt.s32.totalorder %v622, 19
        %v624 = vsel %vm623, %v606, %v614
        %v625 = vsel %vm623, %v608, %v616
        %v626 = vsel %vm623, %v610, %v618
        %v627 = vsel %vm623, %v612, %v620
        %v628 = vsel %vm623, %v598, %v606
        %v629 = vsel %vm623, %v600, %v608
        %v630 = vsel %vm623, %v602, %v610
        %v631 = vsel %vm623, %v604, %v612
        %v632 = vsel %vm623, %v614, %v598
        %v633 = vsel %vm623, %v616, %v600
        %v634 = vsel %vm623, %v618, %v602
        %v635 = vsel %vm623, %v620, %v604
        %636 = vset.pattern.permute.xlu0 0
        %637 = vperm.xlu0 %636, %v561
        %v638 = vpop.permute.xlu0 %637
        %640 = vset.pattern.permute.xlu0 0
        %641 = vperm.xlu0 %640, %v562
        %v642 = vpop.permute.xlu0 %641
        %644 = vset.pattern.permute.xlu0 0
        %645 = vperm.xlu0 %644, %v563
        %v646 = vpop.permute.xlu0 %645
        %648 = vset.pattern.permute.xlu0 0
        %649 = vperm.xlu0 %648, %v564
        %v650 = vpop.permute.xlu0 %649
        %v652 = vmul.f32 %v632, %v638
        %v653 = vmul.f32 %v628, %v638
        %v654 = vmul.f32 %v624, %v638
        %v655 = vmul.f32 %v633, %v642
        %v656 = vmul.f32 %v629, %v642
        %v657 = vmul.f32 %v625, %v642
        %v658 = vmul.f32 %v634, %v646
        %v659 = vmul.f32 %v630, %v646
        %v660 = vmul.f32 %v626, %v646
        %v661 = vmul.f32 %v635, %v650
        %v662 = vmul.f32 %v631, %v650
        %v663 = vmul.f32 %v627, %v650
        %v664 = vadd.f32 %v585, %v652
        %v665 = vadd.f32 %v586, %v653
        %v666 = vadd.f32 %v587, %v654
        %v667 = vadd.f32 %v588, %v655
        %v668 = vadd.f32 %v589, %v656
        %v669 = vadd.f32 %v590, %v657
        %v670 = vadd.f32 %v591, %v658
        %v671 = vadd.f32 %v592, %v659
        %v672 = vadd.f32 %v593, %v660
        %v673 = vadd.f32 %v594, %v661
        %v674 = vadd.f32 %v595, %v662
        %v675 = vadd.f32 %v596, %v663
        %676 = vrot.lane.b32.xlu0 %v549, 18
        %v677 = vpop.permute.xlu0 %676
        %678 = vrot.lane.b32.xlu0 %v552, 18
        %v679 = vpop.permute.xlu0 %678
        %680 = vrot.lane.b32.xlu0 %v555, 18
        %v681 = vpop.permute.xlu0 %680
        %682 = vrot.lane.b32.xlu0 %v558, 18
        %v683 = vpop.permute.xlu0 %682
        %684 = vrot.lane.b32.xlu0 %v550, 18
        %v685 = vpop.permute.xlu0 %684
        %686 = vrot.lane.b32.xlu0 %v553, 18
        %v687 = vpop.permute.xlu0 %686
        %688 = vrot.lane.b32.xlu0 %v556, 18
        %v689 = vpop.permute.xlu0 %688
        %690 = vrot.lane.b32.xlu0 %v559, 18
        %v691 = vpop.permute.xlu0 %690
        %692 = vrot.lane.b32.xlu0 %v551, 18
        %v693 = vpop.permute.xlu0 %692
        %694 = vrot.lane.b32.xlu0 %v554, 18
        %v695 = vpop.permute.xlu0 %694
        %696 = vrot.lane.b32.xlu0 %v557, 18
        %v697 = vpop.permute.xlu0 %696
        %698 = vrot.lane.b32.xlu0 %v560, 18
        %v699 = vpop.permute.xlu0 %698
        %vm700 = vcmp.lt.s32.totalorder %v622, 18
        %v701 = vsel %vm700, %v685, %v693
        %v702 = vsel %vm700, %v687, %v695
        %v703 = vsel %vm700, %v689, %v697
        %v704 = vsel %vm700, %v691, %v699
        %v705 = vsel %vm700, %v677, %v685
        %v706 = vsel %vm700, %v679, %v687
        %v707 = vsel %vm700, %v681, %v689
        %v708 = vsel %vm700, %v683, %v691
        %v709 = vsel %vm700, %v693, %v677
        %v710 = vsel %vm700, %v695, %v679
        %v711 = vsel %vm700, %v697, %v681
        %v712 = vsel %vm700, %v699, %v683
        %713 = vset.pattern.permute.xlu0 1
        %714 = vperm.xlu0 %713, %v561
        %v715 = vpop.permute.xlu0 %714
        %717 = vset.pattern.permute.xlu0 1
        %718 = vperm.xlu0 %717, %v562
        %v719 = vpop.permute.xlu0 %718
        %721 = vset.pattern.permute.xlu0 1
        %722 = vperm.xlu0 %721, %v563
        %v723 = vpop.permute.xlu0 %722
        %725 = vset.pattern.permute.xlu0 1
        %726 = vperm.xlu0 %725, %v564
        %v727 = vpop.permute.xlu0 %726
        %v729 = vmul.f32 %v709, %v715
        %v730 = vmul.f32 %v705, %v715
        %v731 = vmul.f32 %v701, %v715
        %v732 = vmul.f32 %v710, %v719
        %v733 = vmul.f32 %v706, %v719
        %v734 = vmul.f32 %v702, %v719
        %v735 = vmul.f32 %v711, %v723
        %v736 = vmul.f32 %v707, %v723
        %v737 = vmul.f32 %v703, %v723
        %v738 = vmul.f32 %v712, %v727
        %v739 = vmul.f32 %v708, %v727
        %v740 = vmul.f32 %v704, %v727
        %v741 = vadd.f32 %v664, %v729
        %v742 = vadd.f32 %v665, %v730
        %v743 = vadd.f32 %v666, %v731
        %v744 = vadd.f32 %v667, %v732
        %v745 = vadd.f32 %v668, %v733
        %v746 = vadd.f32 %v669, %v734
        %v747 = vadd.f32 %v670, %v735
        %v748 = vadd.f32 %v671, %v736
        %v749 = vadd.f32 %v672, %v737
        %v750 = vadd.f32 %v673, %v738
        %v751 = vadd.f32 %v674, %v739
        %v752 = vadd.f32 %v675, %v740
        %753 = vrot.lane.b32.xlu0 %v549, 17
        %v754 = vpop.permute.xlu0 %753
        %755 = vrot.lane.b32.xlu0 %v552, 17
        %v756 = vpop.permute.xlu0 %755
        %757 = vrot.lane.b32.xlu0 %v555, 17
        %v758 = vpop.permute.xlu0 %757
        %759 = vrot.lane.b32.xlu0 %v558, 17
        %v760 = vpop.permute.xlu0 %759
        %761 = vrot.lane.b32.xlu0 %v550, 17
        %v762 = vpop.permute.xlu0 %761
        %763 = vrot.lane.b32.xlu0 %v553, 17
        %v764 = vpop.permute.xlu0 %763
        %765 = vrot.lane.b32.xlu0 %v556, 17
        %v766 = vpop.permute.xlu0 %765
        %767 = vrot.lane.b32.xlu0 %v559, 17
        %v768 = vpop.permute.xlu0 %767
        %769 = vrot.lane.b32.xlu0 %v551, 17
        %v770 = vpop.permute.xlu0 %769
        %771 = vrot.lane.b32.xlu0 %v554, 17
        %v772 = vpop.permute.xlu0 %771
        %773 = vrot.lane.b32.xlu0 %v557, 17
        %v774 = vpop.permute.xlu0 %773
        %775 = vrot.lane.b32.xlu0 %v560, 17
        %v776 = vpop.permute.xlu0 %775
        %vm777 = vcmp.lt.s32.totalorder %v622, 17
        %v778 = vsel %vm777, %v762, %v770
        %v779 = vsel %vm777, %v764, %v772
        %v780 = vsel %vm777, %v766, %v774
        %v781 = vsel %vm777, %v768, %v776
        %v782 = vsel %vm777, %v754, %v762
        %v783 = vsel %vm777, %v756, %v764
        %v784 = vsel %vm777, %v758, %v766
        %v785 = vsel %vm777, %v760, %v768
        %v786 = vsel %vm777, %v770, %v754
        %v787 = vsel %vm777, %v772, %v756
        %v788 = vsel %vm777, %v774, %v758
        %v789 = vsel %vm777, %v776, %v760
        %790 = vset.pattern.permute.xlu0 2
        %791 = vperm.xlu0 %790, %v561
        %v792 = vpop.permute.xlu0 %791
        %794 = vset.pattern.permute.xlu0 2
        %795 = vperm.xlu0 %794, %v562
        %v796 = vpop.permute.xlu0 %795
        %798 = vset.pattern.permute.xlu0 2
        %799 = vperm.xlu0 %798, %v563
        %v800 = vpop.permute.xlu0 %799
        %802 = vset.pattern.permute.xlu0 2
        %803 = vperm.xlu0 %802, %v564
        %v804 = vpop.permute.xlu0 %803
        %v806 = vmul.f32 %v786, %v792
        %v807 = vmul.f32 %v782, %v792
        %v808 = vmul.f32 %v778, %v792
        %v809 = vmul.f32 %v787, %v796
        %v810 = vmul.f32 %v783, %v796
        %v811 = vmul.f32 %v779, %v796
        %v812 = vmul.f32 %v788, %v800
        %v813 = vmul.f32 %v784, %v800
        %v814 = vmul.f32 %v780, %v800
        %v815 = vmul.f32 %v789, %v804
        %v816 = vmul.f32 %v785, %v804
        %v817 = vmul.f32 %v781, %v804
        %v818 = vadd.f32 %v741, %v806
        %v819 = vadd.f32 %v742, %v807
        %v820 = vadd.f32 %v743, %v808
        %v821 = vadd.f32 %v744, %v809
        %v822 = vadd.f32 %v745, %v810
        %v823 = vadd.f32 %v746, %v811
        %v824 = vadd.f32 %v747, %v812
        %v825 = vadd.f32 %v748, %v813
        %v826 = vadd.f32 %v749, %v814
        %v827 = vadd.f32 %v750, %v815
        %v828 = vadd.f32 %v751, %v816
        %v829 = vadd.f32 %v752, %v817
        %830 = vrot.lane.b32.xlu0 %v549, 1
        %v831 = vpop.permute.xlu0 %830
        %832 = vrot.lane.b32.xlu0 %v552, 1
        %v833 = vpop.permute.xlu0 %832
        %834 = vrot.lane.b32.xlu0 %v555, 1
        %v835 = vpop.permute.xlu0 %834
        %836 = vrot.lane.b32.xlu0 %v558, 1
        %v837 = vpop.permute.xlu0 %836
        %838 = vrot.lane.b32.xlu0 %v550, 1
        %v839 = vpop.permute.xlu0 %838
        %840 = vrot.lane.b32.xlu0 %v553, 1
        %v841 = vpop.permute.xlu0 %840
        %842 = vrot.lane.b32.xlu0 %v556, 1
        %v843 = vpop.permute.xlu0 %842
        %844 = vrot.lane.b32.xlu0 %v559, 1
        %v845 = vpop.permute.xlu0 %844
        %846 = vrot.lane.b32.xlu0 %v551, 1
        %v847 = vpop.permute.xlu0 %846
        %848 = vrot.lane.b32.xlu0 %v554, 1
        %v849 = vpop.permute.xlu0 %848
        %850 = vrot.lane.b32.xlu0 %v557, 1
        %v851 = vpop.permute.xlu0 %850
        %852 = vrot.lane.b32.xlu0 %v560, 1
        %v853 = vpop.permute.xlu0 %852
        %vm854 = vcmp.lt.s32.totalorder %v622, 1
        %v855 = vsel %vm854, %v839, %v847
        %v856 = vsel %vm854, %v841, %v849
        %v857 = vsel %vm854, %v843, %v851
        %v858 = vsel %vm854, %v845, %v853
        %v859 = vsel %vm854, %v831, %v839
        %v860 = vsel %vm854, %v833, %v841
        %v861 = vsel %vm854, %v835, %v843
        %v862 = vsel %vm854, %v837, %v845
        %v863 = vsel %vm854, %v847, %v831
        %v864 = vsel %vm854, %v849, %v833
        %v865 = vsel %vm854, %v851, %v835
        %v866 = vsel %vm854, %v853, %v837
        %867 = vset.pattern.permute.xlu0 3
        %868 = vperm.xlu0 %867, %v561
        %v869 = vpop.permute.xlu0 %868
        %871 = vset.pattern.permute.xlu0 3
        %872 = vperm.xlu0 %871, %v562
        %v873 = vpop.permute.xlu0 %872
        %875 = vset.pattern.permute.xlu0 3
        %876 = vperm.xlu0 %875, %v563
        %v877 = vpop.permute.xlu0 %876
        %879 = vset.pattern.permute.xlu0 3
        %880 = vperm.xlu0 %879, %v564
        %v881 = vpop.permute.xlu0 %880
        %v883 = vmul.f32 %v863, %v869
        %v884 = vmul.f32 %v859, %v869
        %v885 = vmul.f32 %v855, %v869
        %v886 = vmul.f32 %v864, %v873
        %v887 = vmul.f32 %v860, %v873
        %v888 = vmul.f32 %v856, %v873
        %v889 = vmul.f32 %v865, %v877
        %v890 = vmul.f32 %v861, %v877
        %v891 = vmul.f32 %v857, %v877
        %v892 = vmul.f32 %v866, %v881
        %v893 = vmul.f32 %v862, %v881
        %v894 = vmul.f32 %v858, %v881
        %v895 = vadd.f32 %v818, %v883
        %v896 = vadd.f32 %v819, %v884
        %v897 = vadd.f32 %v820, %v885
        %v898 = vadd.f32 %v821, %v886
        %v899 = vadd.f32 %v822, %v887
        %v900 = vadd.f32 %v823, %v888
        %v901 = vadd.f32 %v824, %v889
        %v902 = vadd.f32 %v825, %v890
        %v903 = vadd.f32 %v826, %v891
        %v904 = vadd.f32 %v827, %v892
        %v905 = vadd.f32 %v828, %v893
        %v906 = vadd.f32 %v829, %v894
        %907 = vrot.lane.b32.xlu0 %v549, 127
        %v908 = vpop.permute.xlu0 %907
        %909 = vrot.lane.b32.xlu0 %v552, 127
        %v910 = vpop.permute.xlu0 %909
        %911 = vrot.lane.b32.xlu0 %v555, 127
        %v912 = vpop.permute.xlu0 %911
        %913 = vrot.lane.b32.xlu0 %v558, 127
        %v914 = vpop.permute.xlu0 %913
        %915 = vrot.lane.b32.xlu0 %v550, 127
        %v916 = vpop.permute.xlu0 %915
        %917 = vrot.lane.b32.xlu0 %v553, 127
        %v918 = vpop.permute.xlu0 %917
        %919 = vrot.lane.b32.xlu0 %v556, 127
        %v920 = vpop.permute.xlu0 %919
        %921 = vrot.lane.b32.xlu0 %v559, 127
        %v922 = vpop.permute.xlu0 %921
        %923 = vrot.lane.b32.xlu0 %v551, 127
        %v924 = vpop.permute.xlu0 %923
        %925 = vrot.lane.b32.xlu0 %v554, 127
        %v926 = vpop.permute.xlu0 %925
        %927 = vrot.lane.b32.xlu0 %v557, 127
        %v928 = vpop.permute.xlu0 %927
        %929 = vrot.lane.b32.xlu0 %v560, 127
        %v930 = vpop.permute.xlu0 %929
        %vm931 = vcmp.lt.s32.totalorder %v622, 127
        %v932 = vsel %vm931, %v916, %v924
        %v933 = vsel %vm931, %v918, %v926
        %v934 = vsel %vm931, %v920, %v928
        %v935 = vsel %vm931, %v922, %v930
        %v936 = vsel %vm931, %v908, %v916
        %v937 = vsel %vm931, %v910, %v918
        %v938 = vsel %vm931, %v912, %v920
        %v939 = vsel %vm931, %v914, %v922
        %v940 = vsel %vm931, %v924, %v908
        %v941 = vsel %vm931, %v926, %v910
        %v942 = vsel %vm931, %v928, %v912
        %v943 = vsel %vm931, %v930, %v914
        %944 = vset.pattern.permute.xlu0 5
        %945 = vperm.xlu0 %944, %v561
        %v946 = vpop.permute.xlu0 %945
        %948 = vset.pattern.permute.xlu0 5
        %949 = vperm.xlu0 %948, %v562
        %v950 = vpop.permute.xlu0 %949
        %952 = vset.pattern.permute.xlu0 5
        %953 = vperm.xlu0 %952, %v563
        %v954 = vpop.permute.xlu0 %953
        %956 = vset.pattern.permute.xlu0 5
        %957 = vperm.xlu0 %956, %v564
        %v958 = vpop.permute.xlu0 %957
        %v960 = vmul.f32 %v936, %v946
        %v961 = vmul.f32 %v932, %v946
        %v962 = vmul.f32 %v940, %v946
        %v963 = vmul.f32 %v937, %v950
        %v964 = vmul.f32 %v933, %v950
        %v965 = vmul.f32 %v941, %v950
        %v966 = vmul.f32 %v938, %v954
        %v967 = vmul.f32 %v934, %v954
        %v968 = vmul.f32 %v942, %v954
        %v969 = vmul.f32 %v939, %v958
        %v970 = vmul.f32 %v935, %v958
        %v971 = vmul.f32 %v943, %v958
        %v972 = vadd.f32 %v895, %v960
        %v973 = vadd.f32 %v896, %v961
        %v974 = vadd.f32 %v897, %v962
        %v975 = vadd.f32 %v898, %v963
        %v976 = vadd.f32 %v899, %v964
        %v977 = vadd.f32 %v900, %v965
        %v978 = vadd.f32 %v901, %v966
        %v979 = vadd.f32 %v902, %v967
        %v980 = vadd.f32 %v903, %v968
        %v981 = vadd.f32 %v904, %v969
        %v982 = vadd.f32 %v905, %v970
        %v983 = vadd.f32 %v906, %v971
        %984 = vrot.lane.b32.xlu0 %v549, 111
        %v985 = vpop.permute.xlu0 %984
        %986 = vrot.lane.b32.xlu0 %v552, 111
        %v987 = vpop.permute.xlu0 %986
        %988 = vrot.lane.b32.xlu0 %v555, 111
        %v989 = vpop.permute.xlu0 %988
        %990 = vrot.lane.b32.xlu0 %v558, 111
        %v991 = vpop.permute.xlu0 %990
        %992 = vrot.lane.b32.xlu0 %v550, 111
        %v993 = vpop.permute.xlu0 %992
        %994 = vrot.lane.b32.xlu0 %v553, 111
        %v995 = vpop.permute.xlu0 %994
        %996 = vrot.lane.b32.xlu0 %v556, 111
        %v997 = vpop.permute.xlu0 %996
        %998 = vrot.lane.b32.xlu0 %v559, 111
        %v999 = vpop.permute.xlu0 %998
        %1000 = vrot.lane.b32.xlu0 %v551, 111
        %v1001 = vpop.permute.xlu0 %1000
        %1002 = vrot.lane.b32.xlu0 %v554, 111
        %v1003 = vpop.permute.xlu0 %1002
        %1004 = vrot.lane.b32.xlu0 %v557, 111
        %v1005 = vpop.permute.xlu0 %1004
        %1006 = vrot.lane.b32.xlu0 %v560, 111
        %v1007 = vpop.permute.xlu0 %1006
        %vm1008 = vcmp.lt.s32.totalorder %v622, 111
        %v1009 = vsel %vm1008, %v993, %v1001
        %v1010 = vsel %vm1008, %v995, %v1003
        %v1011 = vsel %vm1008, %v997, %v1005
        %v1012 = vsel %vm1008, %v999, %v1007
        %v1013 = vsel %vm1008, %v985, %v993
        %v1014 = vsel %vm1008, %v987, %v995
        %v1015 = vsel %vm1008, %v989, %v997
        %v1016 = vsel %vm1008, %v991, %v999
        %v1017 = vsel %vm1008, %v1001, %v985
        %v1018 = vsel %vm1008, %v1003, %v987
        %v1019 = vsel %vm1008, %v1005, %v989
        %v1020 = vsel %vm1008, %v1007, %v991
        %1021 = vset.pattern.permute.xlu0 6
        %1022 = vperm.xlu0 %1021, %v561
        %v1023 = vpop.permute.xlu0 %1022
        %1025 = vset.pattern.permute.xlu0 6
        %1026 = vperm.xlu0 %1025, %v562
        %v1027 = vpop.permute.xlu0 %1026
        %1029 = vset.pattern.permute.xlu0 6
        %1030 = vperm.xlu0 %1029, %v563
        %v1031 = vpop.permute.xlu0 %1030
        %1033 = vset.pattern.permute.xlu0 6
        %1034 = vperm.xlu0 %1033, %v564
        %v1035 = vpop.permute.xlu0 %1034
        %v1037 = vmul.f32 %v1013, %v1023
        %v1038 = vmul.f32 %v1009, %v1023
        %v1039 = vmul.f32 %v1017, %v1023
        %v1040 = vmul.f32 %v1014, %v1027
        %v1041 = vmul.f32 %v1010, %v1027
        %v1042 = vmul.f32 %v1018, %v1027
        %v1043 = vmul.f32 %v1015, %v1031
        %v1044 = vmul.f32 %v1011, %v1031
        %v1045 = vmul.f32 %v1019, %v1031
        %v1046 = vmul.f32 %v1016, %v1035
        %v1047 = vmul.f32 %v1012, %v1035
        %v1048 = vmul.f32 %v1020, %v1035
        %v1049 = vadd.f32 %v972, %v1037
        %v1050 = vadd.f32 %v973, %v1038
        %v1051 = vadd.f32 %v974, %v1039
        %v1052 = vadd.f32 %v975, %v1040
        %v1053 = vadd.f32 %v976, %v1041
        %v1054 = vadd.f32 %v977, %v1042
        %v1055 = vadd.f32 %v978, %v1043
        %v1056 = vadd.f32 %v979, %v1044
        %v1057 = vadd.f32 %v980, %v1045
        %v1058 = vadd.f32 %v981, %v1046
        %v1059 = vadd.f32 %v982, %v1047
        %v1060 = vadd.f32 %v983, %v1048
        %1061 = vrot.lane.b32.xlu0 %v549, 110
        %v1062 = vpop.permute.xlu0 %1061
        %1063 = vrot.lane.b32.xlu0 %v552, 110
        %v1064 = vpop.permute.xlu0 %1063
        %1065 = vrot.lane.b32.xlu0 %v555, 110
        %v1066 = vpop.permute.xlu0 %1065
        %1067 = vrot.lane.b32.xlu0 %v558, 110
        %v1068 = vpop.permute.xlu0 %1067
        %1069 = vrot.lane.b32.xlu0 %v550, 110
        %v1070 = vpop.permute.xlu0 %1069
        %1071 = vrot.lane.b32.xlu0 %v553, 110
        %v1072 = vpop.permute.xlu0 %1071
        %1073 = vrot.lane.b32.xlu0 %v556, 110
        %v1074 = vpop.permute.xlu0 %1073
        %1075 = vrot.lane.b32.xlu0 %v559, 110
        %v1076 = vpop.permute.xlu0 %1075
        %1077 = vrot.lane.b32.xlu0 %v551, 110
        %v1078 = vpop.permute.xlu0 %1077
        %1079 = vrot.lane.b32.xlu0 %v554, 110
        %v1080 = vpop.permute.xlu0 %1079
        %1081 = vrot.lane.b32.xlu0 %v557, 110
        %v1082 = vpop.permute.xlu0 %1081
        %1083 = vrot.lane.b32.xlu0 %v560, 110
        %v1084 = vpop.permute.xlu0 %1083
        %vm1085 = vcmp.lt.s32.totalorder %v622, 110
        %v1086 = vsel %vm1085, %v1070, %v1078
        %v1087 = vsel %vm1085, %v1072, %v1080
        %v1088 = vsel %vm1085, %v1074, %v1082
        %v1089 = vsel %vm1085, %v1076, %v1084
        %v1090 = vsel %vm1085, %v1062, %v1070
        %v1091 = vsel %vm1085, %v1064, %v1072
        %v1092 = vsel %vm1085, %v1066, %v1074
        %v1093 = vsel %vm1085, %v1068, %v1076
        %v1094 = vsel %vm1085, %v1078, %v1062
        %v1095 = vsel %vm1085, %v1080, %v1064
        %v1096 = vsel %vm1085, %v1082, %v1066
        %v1097 = vsel %vm1085, %v1084, %v1068
        %1098 = vset.pattern.permute.xlu0 7
        %1099 = vperm.xlu0 %1098, %v561
        %v1100 = vpop.permute.xlu0 %1099
        %1102 = vset.pattern.permute.xlu0 7
        %1103 = vperm.xlu0 %1102, %v562
        %v1104 = vpop.permute.xlu0 %1103
        %1106 = vset.pattern.permute.xlu0 7
        %1107 = vperm.xlu0 %1106, %v563
        %v1108 = vpop.permute.xlu0 %1107
        %1110 = vset.pattern.permute.xlu0 7
        %1111 = vperm.xlu0 %1110, %v564
        %v1112 = vpop.permute.xlu0 %1111
        %v1114 = vmul.f32 %v1090, %v1100
        %v1115 = vmul.f32 %v1086, %v1100
        %v1116 = vmul.f32 %v1094, %v1100
        %v1117 = vmul.f32 %v1091, %v1104
        %v1118 = vmul.f32 %v1087, %v1104
        %v1119 = vmul.f32 %v1095, %v1104
        %v1120 = vmul.f32 %v1092, %v1108
        %v1121 = vmul.f32 %v1088, %v1108
        %v1122 = vmul.f32 %v1096, %v1108
        %v1123 = vmul.f32 %v1093, %v1112
        %v1124 = vmul.f32 %v1089, %v1112
        %v1125 = vmul.f32 %v1097, %v1112
        %v1126 = vadd.f32 %v1049, %v1114
        %v1127 = vadd.f32 %v1050, %v1115
        %v1128 = vadd.f32 %v1051, %v1116
        %v1129 = vadd.f32 %v1052, %v1117
        %v1130 = vadd.f32 %v1053, %v1118
        %v1131 = vadd.f32 %v1054, %v1119
        %v1132 = vadd.f32 %v1055, %v1120
        %v1133 = vadd.f32 %v1056, %v1121
        %v1134 = vadd.f32 %v1057, %v1122
        %v1135 = vadd.f32 %v1058, %v1123
        %v1136 = vadd.f32 %v1059, %v1124
        %v1137 = vadd.f32 %v1060, %v1125
        %1138 = vrot.lane.b32.xlu0 %v549, 109
        %v1139 = vpop.permute.xlu0 %1138
        %1140 = vrot.lane.b32.xlu0 %v552, 109
        %v1141 = vpop.permute.xlu0 %1140
        %1142 = vrot.lane.b32.xlu0 %v555, 109
        %v1143 = vpop.permute.xlu0 %1142
        %1144 = vrot.lane.b32.xlu0 %v558, 109
        %v1145 = vpop.permute.xlu0 %1144
        %1146 = vrot.lane.b32.xlu0 %v550, 109
        %v1147 = vpop.permute.xlu0 %1146
        %1148 = vrot.lane.b32.xlu0 %v553, 109
        %v1149 = vpop.permute.xlu0 %1148
        %1150 = vrot.lane.b32.xlu0 %v556, 109
        %v1151 = vpop.permute.xlu0 %1150
        %1152 = vrot.lane.b32.xlu0 %v559, 109
        %v1153 = vpop.permute.xlu0 %1152
        %1154 = vrot.lane.b32.xlu0 %v551, 109
        %v1155 = vpop.permute.xlu0 %1154
        %1156 = vrot.lane.b32.xlu0 %v554, 109
        %v1157 = vpop.permute.xlu0 %1156
        %1158 = vrot.lane.b32.xlu0 %v557, 109
        %v1159 = vpop.permute.xlu0 %1158
        %1160 = vrot.lane.b32.xlu0 %v560, 109
        %v1161 = vpop.permute.xlu0 %1160
        %vm1162 = vcmp.lt.s32.totalorder %v622, 109
        %v1163 = vsel %vm1162, %v1147, %v1155
        %v1164 = vsel %vm1162, %v1149, %v1157
        %v1165 = vsel %vm1162, %v1151, %v1159
        %v1166 = vsel %vm1162, %v1153, %v1161
        %v1167 = vsel %vm1162, %v1139, %v1147
        %v1168 = vsel %vm1162, %v1141, %v1149
        %v1169 = vsel %vm1162, %v1143, %v1151
        %v1170 = vsel %vm1162, %v1145, %v1153
        %v1171 = vsel %vm1162, %v1155, %v1139
        %v1172 = vsel %vm1162, %v1157, %v1141
        %v1173 = vsel %vm1162, %v1159, %v1143
        %v1174 = vsel %vm1162, %v1161, %v1145
        %1175 = vset.pattern.permute.xlu0 8
        %1176 = vperm.xlu0 %1175, %v561
        %v1177 = vpop.permute.xlu0 %1176
        %1179 = vset.pattern.permute.xlu0 8
        %1180 = vperm.xlu0 %1179, %v562
        %v1181 = vpop.permute.xlu0 %1180
        %1183 = vset.pattern.permute.xlu0 8
        %1184 = vperm.xlu0 %1183, %v563
        %v1185 = vpop.permute.xlu0 %1184
        %1187 = vset.pattern.permute.xlu0 8
        %1188 = vperm.xlu0 %1187, %v564
        %v1189 = vpop.permute.xlu0 %1188
        %v1191 = vmul.f32 %v1167, %v1177
        %v1192 = vmul.f32 %v1163, %v1177
        %v1193 = vmul.f32 %v1171, %v1177
        %v1194 = vmul.f32 %v1168, %v1181
        %v1195 = vmul.f32 %v1164, %v1181
        %v1196 = vmul.f32 %v1172, %v1181
        %v1197 = vmul.f32 %v1169, %v1185
        %v1198 = vmul.f32 %v1165, %v1185
        %v1199 = vmul.f32 %v1173, %v1185
        %v1200 = vmul.f32 %v1170, %v1189
        %v1201 = vmul.f32 %v1166, %v1189
        %v1202 = vmul.f32 %v1174, %v1189
        %v1203 = vadd.f32 %v1126, %v1191
        %v1204 = vadd.f32 %v1127, %v1192
        %v1205 = vadd.f32 %v1128, %v1193
        %v1206 = vadd.f32 %v1129, %v1194
        %v1207 = vadd.f32 %v1130, %v1195
        %v1208 = vadd.f32 %v1131, %v1196
        %v1209 = vadd.f32 %v1132, %v1197
        %v1210 = vadd.f32 %v1133, %v1198
        %v1211 = vadd.f32 %v1134, %v1199
        %v1212 = vadd.f32 %v1135, %v1200
        %v1213 = vadd.f32 %v1136, %v1201
        %v1214 = vadd.f32 %v1137, %v1202
        %vm1215 = vcmp.gt.f32.partialorder %v1203, 0.0
        %vm1216 = vcmp.gt.f32.partialorder %v1204, 0.0
        %vm1217 = vcmp.gt.f32.partialorder %v1205, 0.0
        %vm1218 = vcmp.gt.f32.partialorder %v1206, 0.0
        %vm1219 = vcmp.gt.f32.partialorder %v1207, 0.0
        %vm1220 = vcmp.gt.f32.partialorder %v1208, 0.0
        %vm1221 = vcmp.gt.f32.partialorder %v1209, 0.0
        %vm1222 = vcmp.gt.f32.partialorder %v1210, 0.0
        %vm1223 = vcmp.gt.f32.partialorder %v1211, 0.0
        %vm1224 = vcmp.gt.f32.partialorder %v1212, 0.0
        %vm1225 = vcmp.gt.f32.partialorder %v1213, 0.0
        %vm1226 = vcmp.gt.f32.partialorder %v1214, 0.0
        %v1227 = vmul.f32 %v1203, 0.2
        %v1228 = vmul.f32 %v1204, 0.2
        %v1229 = vmul.f32 %v1205, 0.2
        %v1230 = vmul.f32 %v1206, 0.2
        %v1231 = vmul.f32 %v1207, 0.2
        %v1232 = vmul.f32 %v1208, 0.2
        %v1233 = vmul.f32 %v1209, 0.2
        %v1234 = vmul.f32 %v1210, 0.2
        %v1235 = vmul.f32 %v1211, 0.2
        %v1236 = vmul.f32 %v1212, 0.2
        %v1237 = vmul.f32 %v1213, 0.2
        %v1238 = vmul.f32 %v1214, 0.2
        %v1239 = vsel %vm1215, %v1203, %v1227
        %v1240 = vsel %vm1216, %v1204, %v1228
        %v1241 = vsel %vm1217, %v1205, %v1229
        %v1242 = vsel %vm1218, %v1206, %v1230
        %v1243 = vsel %vm1219, %v1207, %v1231
        %v1244 = vsel %vm1220, %v1208, %v1232
        %v1245 = vsel %vm1221, %v1209, %v1233
        %v1246 = vsel %vm1222, %v1210, %v1234
        %v1247 = vsel %vm1223, %v1211, %v1235
        %v1248 = vsel %vm1224, %v1212, %v1236
        %v1249 = vsel %vm1225, %v1213, %v1237
        %v1250 = vsel %vm1226, %v1214, %v1238
        %v1251 = vld [vmem:[%s1] sm:$0x7]
        %v1253 = vlaneseq
        %v1254 = vshrl.u32 %v1253, 7
        %v1255 = vsub.s32 0, %v1254
        %v1256 = vrot.slane %v1251, %v1255
        %v1257 = vlaneseq
        %v1258 = vshrl.u32 %v1257, 7
        %v1259 = vsub.s32 1, %v1258
        %v1260 = vrot.slane %v1251, %v1259
        %v1261 = vlaneseq
        %v1262 = vshrl.u32 %v1261, 7
        %v1263 = vsub.s32 2, %v1262
        %v1264 = vrot.slane %v1251, %v1263
        %v1268 = vmul.f32 %v1239, %v1256
        %v1269 = vmul.f32 %v1240, %v1260
        %v1270 = vmul.f32 %v1241, %v1264
        %v1271 = vmul.f32 %v1242, %v1256
        %v1272 = vmul.f32 %v1243, %v1260
        %v1273 = vmul.f32 %v1244, %v1264
        %v1274 = vmul.f32 %v1245, %v1256
        %v1275 = vmul.f32 %v1246, %v1260
        %v1276 = vmul.f32 %v1247, %v1264
        %v1277 = vmul.f32 %v1248, %v1256
        %v1278 = vmul.f32 %v1249, %v1260
        %v1279 = vmul.f32 %v1250, %v1264
        %v1280 = vadd.f32 %v1268, %v1269
        %v1281 = vadd.f32 %v1280, %v1270
        %1282 = vadd.xlane.f32.xlu0 %v1281
        %v1283 = vpop.xlane.xlu0 %1282
        %v1284 = vadd.f32 %v1271, %v1272
        %v1285 = vadd.f32 %v1284, %v1273
        %1286 = vadd.xlane.f32.xlu0 %v1285
        %v1287 = vpop.xlane.xlu0 %1286
        %v1288 = vadd.f32 %v1274, %v1275
        %v1289 = vadd.f32 %v1288, %v1276
        %1290 = vadd.xlane.f32.xlu0 %v1289
        %v1291 = vpop.xlane.xlu0 %1290
        %v1292 = vadd.f32 %v1277, %v1278
        %v1293 = vadd.f32 %v1292, %v1279
        %1294 = vadd.xlane.f32.xlu0 %v1293
        %v1295 = vpop.xlane.xlu0 %1294
        %v1296 = vmul.f32 %v1283, 0.00390625
        %v1297 = vmul.f32 %v1287, 0.00390625
        %v1298 = vmul.f32 %v1291, 0.00390625
        %v1299 = vmul.f32 %v1295, 0.00390625
        %v1300 = vld [vmem:[%s4] sm:$0xff]
        %v1301 = vld [vmem:[%s4 + $0x8] sm:$0xff]
        %v1302 = vld [vmem:[%s4 + $0x10] sm:$0xff]
        %v1303 = vld [vmem:[%s4 + $0x18] sm:$0xff]
        %v1304 = vmul.f32 %v1296, %v1300
        %v1305 = vmul.f32 %v1297, %v1301
        %v1306 = vmul.f32 %v1298, %v1302
        %v1307 = vmul.f32 %v1299, %v1303
        %v1308 = vsel %vm338, %v1304, 0.0
        %v1309 = vsel %vm338, %v1305, 0.0
        %v1310 = vadd.f32 %v1308, %v1309
        %v1311 = vsel %vm338, %v1306, 0.0
        %v1312 = vadd.f32 %v1310, %v1311
        %v1313 = vsel %vm338, %v1307, 0.0
        %v1314 = vadd.f32 %v1312, %v1313
        %v1315 = vrot.slane %v1314, 4
        %v1316 = vadd.f32 %v1314, %v1315
        %v1317 = vrot.slane %v1316, 2
        %v1318 = vadd.f32 %v1316, %v1317
        %v1319 = vrot.slane %v1318, 1
        %v1320 = vadd.f32 %v1318, %v1319
        %v1321 = vld [vmem:[%s5] sm:$0x1]
        %v1322 = vadd.f32 %v1320, %v1321
        %v1323 = vxor.u32 %v1322, 2147483648
        %v1324 = vmul.f32 %v1323, 1.442695
        %v1325 = vpow.pop %v1324
        %v1326 = vadd.f32 %v1325, 1.0
        %v1327 = vrcp.pop %v1326
        %v1328 = vmul.f32 1.0, %v1327
        %v1329 = vmul.f32 %v1322, %v1328
        %v1330 = vld [vmem:[%s6] sm:$0xff]
        %v1331 = vld [vmem:[%s6 + $0x8] sm:$0xff]
        %v1332 = vld [vmem:[%s6 + $0x10] sm:$0xff]
        %v1333 = vld [vmem:[%s6 + $0x18] sm:$0xff]
        %v1334 = vlaneseq
        %v1335 = vshrl.u32 %v1334, 7
        %v1336 = vsub.s32 0, %v1335
        %v1337 = vrot.slane %v1329, %v1336
        %v1338 = vmul.f32 %v1337, %v1330
        %v1339 = vmul.f32 %v1337, %v1331
        %v1340 = vmul.f32 %v1337, %v1332
        %v1341 = vmul.f32 %v1337, %v1333
        %v1342 = vsel %vm338, %v1338, 0.0
        %1343 = vadd.xlane.f32.xlu0 %v1342
        %v1344 = vpop.xlane.xlu0 %1343
        %v1345 = vsel %vm338, %v1339, 0.0
        %1346 = vadd.xlane.f32.xlu0 %v1345
        %v1347 = vpop.xlane.xlu0 %1346
        %v1348 = vsel %vm338, %v1340, 0.0
        %1349 = vadd.xlane.f32.xlu0 %v1348
        %v1350 = vpop.xlane.xlu0 %1349
        %v1351 = vsel %vm338, %v1341, 0.0
        %1352 = vadd.xlane.f32.xlu0 %v1351
        %v1353 = vpop.xlane.xlu0 %1352
        %v1354 = vld [vmem:[%s7] sm:$0xff]
        %v1355 = vld [vmem:[%s7 + $0x8] sm:$0xff]
        %v1356 = vld [vmem:[%s7 + $0x10] sm:$0xff]
        %v1357 = vld [vmem:[%s7 + $0x18] sm:$0xff]
        %v1358 = vadd.f32 %v1344, %v1354
        %v1359 = vadd.f32 %v1347, %v1355
        %v1360 = vadd.f32 %v1350, %v1356
        %v1361 = vadd.f32 %v1353, %v1357
        %v1362 = vxor.u32 %v1358, 2147483648
        %v1363 = vxor.u32 %v1359, 2147483648
        %v1364 = vxor.u32 %v1360, 2147483648
        %v1365 = vxor.u32 %v1361, 2147483648
        %v1366 = vmul.f32 %v1362, 1.442695
        %v1367 = vpow.pop %v1366
        %v1368 = vmul.f32 %v1363, 1.442695
        %v1369 = vpow.pop %v1368
        %v1370 = vmul.f32 %v1364, 1.442695
        %v1371 = vpow.pop %v1370
        %v1372 = vmul.f32 %v1365, 1.442695
        %v1373 = vpow.pop %v1372
        %v1374 = vadd.f32 %v1367, 1.0
        %v1375 = vadd.f32 %v1369, 1.0
        %v1376 = vadd.f32 %v1371, 1.0
        %v1377 = vadd.f32 %v1373, 1.0
        %v1378 = vrcp.pop %v1374
        %v1379 = vmul.f32 1.0, %v1378
        %v1380 = vrcp.pop %v1375
        %v1381 = vmul.f32 1.0, %v1380
        %v1382 = vrcp.pop %v1376
        %v1383 = vmul.f32 1.0, %v1382
        %v1384 = vrcp.pop %v1377
        %v1385 = vmul.f32 1.0, %v1384
        %1387 = vset.pattern.permute.xlu0 0
        %1388 = vperm.xlu0 %1387, %v1379
        %v1389 = vpop.permute.xlu0 %1388
        %1392 = vset.pattern.permute.xlu0 0
        %1393 = vperm.xlu0 %1392, %v1381
        %v1394 = vpop.permute.xlu0 %1393
        %1397 = vset.pattern.permute.xlu0 0
        %1398 = vperm.xlu0 %1397, %v1383
        %v1399 = vpop.permute.xlu0 %1398
        %1402 = vset.pattern.permute.xlu0 0
        %1403 = vperm.xlu0 %1402, %v1385
        %v1404 = vpop.permute.xlu0 %1403
        %v1406 = vmul.f32 %v1268, %v1389
        %v1407 = vmul.f32 %v1269, %v1389
        %v1408 = vmul.f32 %v1270, %v1389
        %v1409 = vmul.f32 %v1271, %v1394
        %v1410 = vmul.f32 %v1272, %v1394
        %v1411 = vmul.f32 %v1273, %v1394
        %v1412 = vmul.f32 %v1274, %v1399
        %v1413 = vmul.f32 %v1275, %v1399
        %v1414 = vmul.f32 %v1276, %v1399
        %v1415 = vmul.f32 %v1277, %v1404
        %v1416 = vmul.f32 %v1278, %v1404
        %v1417 = vmul.f32 %v1279, %v1404
        %v1418 = vld [vmem:[%s8] sm:$0xff]
        %vm1419 = vcmask 261120
        %v1421 = vsel %vm1419, %v1418, 0
        %1423 = vmatprep.subr.mxu0 %v1407
        %1424 = vmatpush1.msra.mxu0 %v1406
        %1425 = vmatprep.subr.mxu0 %v1410
        %1426 = vmatpush1.msra.mxu0 %v1409
        %1427 = vmatprep.subr.mxu0 %v1413
        %1428 = vmatpush1.msra.mxu0 %v1412
        %1429 = vmatprep.subr.mxu0 %v1416
        %1430 = vmatpush1.msra.mxu0 %v1415
        %1431 = vmatprep.subr.mxu0 0.0
        %1432 = vmatpush1.msra.mxu0 0.0
        %1433 = vmatprep.subr.mxu0 0.0
        %1434 = vmatpush1.msra.mxu0 0.0
        %1435 = vmatprep.subr.mxu0 0.0
        %1436 = vmatpush1.msra.mxu0 0.0
        %1437 = vmatprep.subr.mxu0 0.0
        %1438 = vmatpush1.msra.mxu0 0.0
        %1439 = vmatprep.subr.mxu0 0.0
        %1440 = vmatpush1.msra.mxu0 0.0
        %1441 = vmatprep.subr.mxu0 0.0
        %1442 = vmatpush1.msra.mxu0 0.0
        %1443 = vmatprep.subr.mxu0 0.0
        %1444 = vmatpush1.msra.mxu0 0.0
        %1445 = vmatprep.subr.mxu0 0.0
        %1446 = vmatpush1.msra.mxu0 0.0
        %1447 = vmatprep.subr.mxu0 0.0
        %1448 = vmatpush1.msra.mxu0 0.0
        %1449 = vmatprep.subr.mxu0 0.0
        %1450 = vmatpush1.msra.mxu0 0.0
        %1451 = vmatprep.subr.mxu0 0.0
        %1452 = vmatpush1.msra.mxu0 0.0
        %1453 = vmatprep.subr.mxu0 0.0
        %1454 = vmatpush1.msra.mxu0 0.0
        %1455 = vmatprep.subr.mxu0 0.0
        %1456 = vmatpush1.msra.mxu0 0.0
        %1457 = vmatprep.subr.mxu0 0.0
        %1458 = vmatpush1.msra.mxu0 0.0
        %1459 = vmatprep.subr.mxu0 0.0
        %1460 = vmatpush1.msra.mxu0 0.0
        %1461 = vmatprep.subr.mxu0 0.0
        %1462 = vmatpush1.msra.mxu0 0.0
        %1463 = vmatprep.subr.mxu0 0.0
        %1464 = vmatpush1.msra.mxu0 0.0
        %1465 = vmatprep.subr.mxu0 0.0
        %1466 = vmatpush1.msra.mxu0 0.0
        %1467 = vmatprep.subr.mxu0 0.0
        %1468 = vmatpush1.msra.mxu0 0.0
        %1469 = vmatprep.subr.mxu0 0.0
        %1470 = vmatpush1.msra.mxu0 0.0
        %1471 = vmatprep.subr.mxu0 0.0
        %1472 = vmatpush1.msra.mxu0 0.0
        %1473 = vmatprep.subr.mxu0 0.0
        %1474 = vmatpush1.msra.mxu0 0.0
        %1475 = vmatprep.subr.mxu0 0.0
        %1476 = vmatpush1.msra.mxu0 0.0
        %1477 = vmatprep.subr.mxu0 0.0
        %1478 = vmatpush1.msra.mxu0 0.0
        %1479 = vmatprep.subr.mxu0 0.0
        %1480 = vmatpush1.msra.mxu0 0.0
        %1481 = vmatprep.subr.mxu0 0.0
        %1482 = vmatpush1.msra.mxu0 0.0
        %1483 = vmatprep.subr.mxu0 0.0
        %1484 = vmatpush1.msra.mxu0 0.0
        %1485 = vmatprep.subr.mxu0 0.0
        %1486 = vmatpush1.msra.mxu0 0.0
        %1487 = vmatprep.mubr.f32.mxu0 0.0
        %1488 = vmatmul.mubr.f32.gmra.mrb[0].mxu0 %v1421
        %v1489 = vpop.f32.mrb[0].mxu0
        %v1490 = vadd.f32 %v331, %v1489
        %v1491 = vpop.f32.mrb[0].mxu0
        %v1492 = vadd.f32 %v332, %v1491
        %1493 = vdwg.mxu0
        %1494 = vmatprep.subr.mxu0 0.0
        %1495 = vmatpush1.msra.mxu0 %v1408
        %1496 = vmatprep.subr.mxu0 0.0
        %1497 = vmatpush1.msra.mxu0 %v1411
        %1498 = vmatprep.subr.mxu0 0.0
        %1499 = vmatpush1.msra.mxu0 %v1414
        %1500 = vmatprep.subr.mxu0 0.0
        %1501 = vmatpush1.msra.mxu0 %v1417
        %1502 = vmatprep.subr.mxu0 0.0
        %1503 = vmatpush1.msra.mxu0 0.0
        %1504 = vmatprep.subr.mxu0 0.0
        %1505 = vmatpush1.msra.mxu0 0.0
        %1506 = vmatprep.subr.mxu0 0.0
        %1507 = vmatpush1.msra.mxu0 0.0
        %1508 = vmatprep.subr.mxu0 0.0
        %1509 = vmatpush1.msra.mxu0 0.0
        %1510 = vmatprep.subr.mxu0 0.0
        %1511 = vmatpush1.msra.mxu0 0.0
        %1512 = vmatprep.subr.mxu0 0.0
        %1513 = vmatpush1.msra.mxu0 0.0
        %1514 = vmatprep.subr.mxu0 0.0
        %1515 = vmatpush1.msra.mxu0 0.0
        %1516 = vmatprep.subr.mxu0 0.0
        %1517 = vmatpush1.msra.mxu0 0.0
        %1518 = vmatprep.subr.mxu0 0.0
        %1519 = vmatpush1.msra.mxu0 0.0
        %1520 = vmatprep.subr.mxu0 0.0
        %1521 = vmatpush1.msra.mxu0 0.0
        %1522 = vmatprep.subr.mxu0 0.0
        %1523 = vmatpush1.msra.mxu0 0.0
        %1524 = vmatprep.subr.mxu0 0.0
        %1525 = vmatpush1.msra.mxu0 0.0
        %1526 = vmatprep.subr.mxu0 0.0
        %1527 = vmatpush1.msra.mxu0 0.0
        %1528 = vmatprep.subr.mxu0 0.0
        %1529 = vmatpush1.msra.mxu0 0.0
        %1530 = vmatprep.subr.mxu0 0.0
        %1531 = vmatpush1.msra.mxu0 0.0
        %1532 = vmatprep.subr.mxu0 0.0
        %1533 = vmatpush1.msra.mxu0 0.0
        %1534 = vmatprep.subr.mxu0 0.0
        %1535 = vmatpush1.msra.mxu0 0.0
        %1536 = vmatprep.subr.mxu0 0.0
        %1537 = vmatpush1.msra.mxu0 0.0
        %1538 = vmatprep.subr.mxu0 0.0
        %1539 = vmatpush1.msra.mxu0 0.0
        %1540 = vmatprep.subr.mxu0 0.0
        %1541 = vmatpush1.msra.mxu0 0.0
        %1542 = vmatprep.subr.mxu0 0.0
        %1543 = vmatpush1.msra.mxu0 0.0
        %1544 = vmatprep.subr.mxu0 0.0
        %1545 = vmatpush1.msra.mxu0 0.0
        %1546 = vmatprep.subr.mxu0 0.0
        %1547 = vmatpush1.msra.mxu0 0.0
        %1548 = vmatprep.subr.mxu0 0.0
        %1549 = vmatpush1.msra.mxu0 0.0
        %1550 = vmatprep.subr.mxu0 0.0
        %1551 = vmatpush1.msra.mxu0 0.0
        %1552 = vmatprep.subr.mxu0 0.0
        %1553 = vmatpush1.msra.mxu0 0.0
        %1554 = vmatprep.subr.mxu0 0.0
        %1555 = vmatpush1.msra.mxu0 0.0
        %1556 = vmatprep.subr.mxu0 0.0
        %1557 = vmatpush1.msra.mxu0 0.0
        %1558 = vmatprep.mubr.f32.mxu0 0.0
        %1559 = vmatmul.mubr.f32.gmra.mrb[0].mxu0 %v1421
        %v1560 = vpop.f32.mrb[0].mxu0
        %v1561 = vadd.f32 %v333, %v1560
        %v1562 = vpop.f32.mrb[0].mxu0
        %1563 = vdwg.mxu0
        %1564 = vst [vmem:[%s325] sm:$0xff] %v1490
        %1565 = vst [vmem:[%s325 + $0x8] sm:$0xff] %v1492
        %1566 = vst [vmem:[%s325 + $0x10] sm:$0xff] %v1561
        %s1567 = sand.u32 %s225, 1
        %s1568 = scalar_lea.sflag [#allocation3], %s1567
        %s1569 = sand.u32 %s225, 1
        %s1570 = smul.addr %s1569, 24
        %s1571 = scalar_lea.vmem [#allocation2], %s1570
        // Predicated region
        $region57: #{tpu_custom_call.1} parent=55 // pred_check
          %p1572 = pneg %p235
        $region58: #{tpu_custom_call.1} parent=55 // pred_check_branch
          %1574 = sbr.rel (%p1572) target = $region60
        $region59: #{tpu_custom_call.1} parent=55 // pred_region
          %s1576 = ssub.s32 384, 384
          %1577 = vsyncadd %s1568, %s1576
          %s1578 = smul.addr %s23, 3
          %s1579 = smul.addr %s1578, 128
          %s1580 = scalar_lea.hbm %s9, %s1579
          %s1582 = sshll.u32 %s1571, 4
          %s1583 = int_to_ptr.vmem [resolvable:$true] %s1582
          %1585 = dma.vmem_to_hbm [thread:$0]  %s1583, 384, %s1580, %s1568
        $region60: #{tpu_custom_call.1} parent=55 // pred_fallthru
          _
      $region56: #{tpu_custom_call.1} parent=5 // pred_fallthru
        _
      %p1586 = scmp.le.s32.totalorder 2, %s18
      // Predicated region
      $region61: #{tpu_custom_call.1} parent=5 // pred_check
        %p1587 = pneg %p1586
      $region62: #{tpu_custom_call.1} parent=5 // pred_check_branch
        %1589 = sbr.rel (%p1587) target = $region64
      $region63: #{tpu_custom_call.1} parent=5 // pred_region
        %s1590 = ssub.s32 %s18, 2
        // Predicated region
        $region65: #{tpu_custom_call.1} parent=63 // pred_check
          %p1591 = pneg %p241
        $region66: #{tpu_custom_call.1} parent=63 // pred_check_branch
          %1593 = sbr.rel (%p1591) target = $region68
        $region67: #{tpu_custom_call.1} parent=63 // pred_region
          %s1594 = sand.u32 %s226, 1
          %s1595 = scalar_lea.sflag [#allocation3], %s1594
          %s1596 = sand.u32 %s226, 1
          %s1597 = smul.addr %s1596, 24
          %s1598 = scalar_lea.vmem [#allocation2], %s1597
          %1599 = dma.done %s1595, 384
        $region68: #{tpu_custom_call.1} parent=63 // pred_fallthru
          _
      $region64: #{tpu_custom_call.1} parent=5 // pred_fallthru
        _
    $region6: #{tpu_custom_call.1} parent=1 // loop_footer
      %s22 = sadd.s32 1, %s18
    $region7: #{tpu_custom_call.1} parent=1 // loop_footer_branch
      %17 = sbr.rel target = $region3
    $region8: #{tpu_custom_call.1} parent=1 // loop_exit
      _
    %1600 = vsyncpa [#allocation3], 1
    %s1601 = scalar_lea.sflag [#allocation3], 1
    %1602 = vsyncpa %s1601, 1

</llo_original>
